<compile_context>
chip_gen: v5e
topology: v5e:2x2
jax: 0.10.0
libtpu: 0.0.40
codegen_flags: <defaults>
</compile_context>

<pallas_src>
import functools
import math

import numpy as np

import jax
import jax.numpy as jnp
from jax.experimental import pallas as pl
from jax.experimental.pallas import tpu as pltpu


# ---------------------------------------------------------------------------
# Small host-side helpers.
# ---------------------------------------------------------------------------
def _ceil_div(a, b):
    return -(-a // b)


def _round_up(n, m):
    return _ceil_div(n, m) * m


def _win_sinc(t, n, scale, num_zeros):
    """W[i, j] = windowed-sinc weight of input sample n[j] for output time t[i]."""
    t = np.asarray(t, np.float64)
    n = np.asarray(n, np.float64)
    z = scale * (t[:, None] - n[None, :])
    w = scale * np.sinc(z) * 0.5 * (1.0 + np.cos(np.pi * z / num_zeros))
    w = np.where(np.abs(z) < num_zeros, w, 0.0)
    return w.astype(np.float32)


# ---------------------------------------------------------------------------
# Host precompute (cached): banded bf16 filter blocks + per-block input offsets.
# ---------------------------------------------------------------------------
@functools.lru_cache(maxsize=16)
def _banded_resample_plan(L, orig_sr, sr, num_zeros, tn):
    n_mid = _ceil_div(L * sr, orig_sr)       # length after orig_sr -> sr
    n_out = _ceil_div(n_mid * orig_sr, sr)   # length after sr -> orig_sr

    ratio_d = orig_sr / sr                   # input samples per mid sample
    ratio_u = sr / orig_sr                   # mid samples per output sample
    scale_d = min(1.0, sr / orig_sr)         # anti-alias cutoff (down pass)
    scale_u = min(1.0, orig_sr / sr)
    half_d = num_zeros / scale_d             # filter half-width in input samples
    half_u = num_zeros / scale_u             # filter half-width in mid samples

    nj = _ceil_div(n_out, tn)
    mid_lo, x_lo = [], []
    mid_w = x_w = 0
    for j in range(nj):
        m0, m1 = j * tn, min((j + 1) * tn, n_out) - 1
        p0 = math.floor(m0 * ratio_u - half_u)            # mid band (may be < 0)
        p1 = math.ceil(m1 * ratio_u + half_u)
        n0 = max(0, math.floor(p0 * ratio_d - half_d))    # input band
        n1 = math.ceil(p1 * ratio_d + half_d)
        n0 = (n0 // 128) * 128                            # lane-aligned window start
        mid_lo.append(p0)
        x_lo.append(n0)
        mid_w = max(mid_w, p1 - p0 + 1)
        x_w = max(x_w, n1 - n0 + 1)

    band_mid = _round_up(mid_w, 128)
    band_x = _round_up(x_w, 128)
    Lp = _round_up(max(L, max(s + band_x for s in x_lo)), 128)

    wd = np.zeros((nj, band_x, band_mid), np.float32)     # (input, mid) per block
    wu = np.zeros((nj, band_mid, tn), np.float32)         # (mid, out)   per block
    for j in range(nj):
        n_idx = x_lo[j] + np.arange(band_x)
        p_idx = mid_lo[j] + np.arange(band_mid)
        m_idx = j * tn + np.arange(tn)
        vn = (n_idx < L).astype(np.float32)
        vp = ((p_idx >= 0) & (p_idx < n_mid)).astype(np.float32)
        vm = (m_idx < n_out).astype(np.float32)
        wd[j] = (_win_sinc(p_idx * ratio_d, n_idx, scale_d, num_zeros).T
                 * vn[:, None] * vp[None, :])
        wu[j] = (_win_sinc(m_idx * ratio_u, p_idx, scale_u, num_zeros).T
                 * vp[:, None] * vm[None, :])

    return (jnp.asarray(wd, dtype=jnp.bfloat16),
            jnp.asarray(wu, dtype=jnp.bfloat16),
            np.asarray(x_lo, np.int32),
            band_x, Lp, n_mid, n_out, nj)


# ---------------------------------------------------------------------------
# Fused banded kernel: per output block j,
#   mid = x_window @ wd_band[j]   (B, band_x) @ (band_x, band_mid)
#   out = mid      @ wu_band[j]   (B, band_mid) @ (band_mid, tn)
# Everything bf16 on the MXU with f32 accumulation; "mid" never leaves VMEM.
# ---------------------------------------------------------------------------
def _resample_kernel(xw_ref, wd_ref, wu_ref, o_ref):
    mid = jnp.dot(xw_ref[...], wd_ref[...], preferred_element_type=jnp.float32)
    out = jnp.dot(mid.astype(wu_ref.dtype), wu_ref[...],
                  preferred_element_type=jnp.float32)
    o_ref[...] = out.astype(o_ref.dtype)


def _fused_banded_matmul(xw, wd_band, wu_band, *, tn):
    nj, Bp, band_x = xw.shape
    band_mid = wd_band.shape[2]
    return pl.pallas_call(
        _resample_kernel,
        out_shape=jax.ShapeDtypeStruct((Bp, nj * tn), jnp.float32),
        grid_spec=pltpu.PrefetchScalarGridSpec(
            num_scalar_prefetch=0,
            grid=(nj,),
            in_specs=[
                pl.BlockSpec((None, Bp, band_x), lambda j: (j, 0, 0)),
                pl.BlockSpec((None, band_x, band_mid), lambda j: (j, 0, 0)),
                pl.BlockSpec((None, band_mid, tn), lambda j: (j, 0, 0)),
            ],
            out_specs=pl.BlockSpec((Bp, tn), lambda j: (0, j)),
        ),
        compiler_params=pltpu.CompilerParams(
            dimension_semantics=("parallel",),
        ),
    )(xw, wd_band, wu_band)


# ---------------------------------------------------------------------------
# Resample attack: orig_sr -> sr -> orig_sr along the last axis.
# ---------------------------------------------------------------------------
def resample_attack(audio, orig_sr, sr, *, num_zeros=16, tn=512):
    orig_shape = audio.shape
    L = int(orig_shape[-1])
    (wd_band, wu_band, x_lo, band_x, Lp, _n_mid, n_out, nj) = _banded_resample_plan(
        L, int(orig_sr), int(sr), int(num_zeros), int(tn))

    x = audio.astype(jnp.float32).reshape(-1, L)
    B = x.shape[0]
    Bp = _round_up(max(B, 16), 16)                         # sublane / MXU M fill
    x_pad = jnp.pad(x, ((0, Bp - B), (0, Lp - L)))

    # Stage the (overlapping) per-block input windows: (nj, Bp, band_x) bf16.
    widx = jnp.asarray(x_lo[:, None] + np.arange(band_x, dtype=np.int32)[None, :])
    xw = jnp.take(x_pad, widx, axis=1).swapaxes(0, 1).astype(jnp.bfloat16)

    out = _fused_banded_matmul(xw, wd_band, wu_band, tn=tn)
    # NOTE: n_out can differ from L for non-commensurate rate pairs (matches resampy).
    return out[:B, :n_out].reshape(orig_shape[:-1] + (n_out,))


if __name__ == "__main__":
    key = jax.random.PRNGKey(0)
    batch, channels, L = 2, 4, 2048
    orig_sr, sr = 16000, 8000          # representative opt['AttackLayer']['Resample']
    audio = jax.random.normal(key, (batch, channels, L), dtype=jnp.float32)

    out = jax.block_until_ready(resample_attack(audio, orig_sr, sr))

    # Reference: same two linear maps, dense f32 matrices, highest-precision matmuls.
    num_zeros = 16
    n_mid = _ceil_div(L * sr, orig_sr)
    n_out = _ceil_div(n_mid * orig_sr, sr)
    wd_dense = _win_sinc(np.arange(n_mid) * (orig_sr / sr), np.arange(L),
                         min(1.0, sr / orig_sr), num_zeros)            # (n_mid, L)
    wu_dense = _win_sinc(np.arange(n_out) * (sr / orig_sr), np.arange(n_mid),
                         min(1.0, orig_sr / sr), num_zeros)            # (n_out, n_mid)
    x2 = audio.reshape(-1, L)
    ref = jnp.matmul(
        jnp.matmul(x2, jnp.asarray(wd_dense.T), precision=jax.lax.Precision.HIGHEST),
        jnp.asarray(wu_dense.T), precision=jax.lax.Precision.HIGHEST,
    ).reshape(batch, channels, n_out)

    assert out.shape == (batch, channels, n_out) and out.dtype == jnp.float32
    max_err = float(jnp.max(jnp.abs(out - ref)))
    ref_scale = float(jnp.max(jnp.abs(ref))) + 1e-6
    assert max_err <= 2e-2 * ref_scale, (max_err, ref_scale)

    print("KERNEL_OK")
</pallas_src>

<mosaic_0001>
module attributes {stable_mosaic.version = 11 : i64} {
  func.func @_resample_kernel(%arg0: i32, %arg1: memref<1x16x768xbf16, #tpu.memory_space<vmem>>, %arg2: memref<1x768x384xbf16, #tpu.memory_space<vmem>>, %arg3: memref<1x384x512xbf16, #tpu.memory_space<vmem>>, %arg4: memref<16x512xf32, #tpu.memory_space<vmem>>) attributes {dimension_semantics = [#tpu.dimension_semantics<parallel>], iteration_bounds = array<i64: 4>, scalar_prefetch = 0 : i64, scratch_operands = 0 : i64, tpu.core_type = #tpu.core_type<tc>, window_params = [{transform_indices = @transform_0, window_bounds = array<i64: 1, 16, 768>}, {transform_indices = @transform_1, window_bounds = array<i64: 1, 768, 384>}, {transform_indices = @transform_2, window_bounds = array<i64: 1, 384, 512>}, {transform_indices = @transform_3, window_bounds = array<i64: 16, 512>}]} {
    %c0 = arith.constant 0 : index
    %c0_0 = arith.constant 0 : index
    %c0_1 = arith.constant 0 : index
    %0 = vector.load %arg1[%c0, %c0_0, %c0_1] : memref<1x16x768xbf16, #tpu.memory_space<vmem>>, vector<1x16x768xbf16>
    %1 = vector.shape_cast %0 : vector<1x16x768xbf16> to vector<16x768xbf16>
    %c0_2 = arith.constant 0 : index
    %c0_3 = arith.constant 0 : index
    %c0_4 = arith.constant 0 : index
    %2 = vector.load %arg2[%c0_2, %c0_3, %c0_4] : memref<1x768x384xbf16, #tpu.memory_space<vmem>>, vector<1x768x384xbf16>
    %3 = vector.shape_cast %2 : vector<1x768x384xbf16> to vector<768x384xbf16>
    %cst = arith.constant dense<0.000000e+00> : vector<16x384xf32>
    %4 = tpu.matmul %1, %3, %cst {dimension_numbers = #tpu.dot_dimension_numbers<[1], [0], [0], [1], [0, 0, 1, 1], [], []>} : vector<16x768xbf16>, vector<768x384xbf16>, vector<16x384xf32> -> vector<16x384xf32>
    %5 = arith.truncf %4 : vector<16x384xf32> to vector<16x384xbf16>
    %c0_5 = arith.constant 0 : index
    %c0_6 = arith.constant 0 : index
    %c0_7 = arith.constant 0 : index
    %6 = vector.load %arg3[%c0_5, %c0_6, %c0_7] : memref<1x384x512xbf16, #tpu.memory_space<vmem>>, vector<1x384x512xbf16>
    %7 = vector.shape_cast %6 : vector<1x384x512xbf16> to vector<384x512xbf16>
    %cst_8 = arith.constant dense<0.000000e+00> : vector<16x512xf32>
    %8 = tpu.matmul %5, %7, %cst_8 {dimension_numbers = #tpu.dot_dimension_numbers<[1], [0], [0], [1], [0, 0, 1, 1], [], []>} : vector<16x384xbf16>, vector<384x512xbf16>, vector<16x512xf32> -> vector<16x512xf32>
    %c0_9 = arith.constant 0 : index
    %c0_10 = arith.constant 0 : index
    %9 = vector.load %arg4[%c0_9, %c0_10] : memref<16x512xf32, #tpu.memory_space<vmem>>, vector<16x512xf32>
    tpu.vector_store %arg4[%c0_9, %c0_10], %8 {strides = array<i32>} : memref<16x512xf32, #tpu.memory_space<vmem>>, vector<16x512xf32>,
    return
  }
  func.func @transform_0(%arg0: i32) -> (i32, i32, i32) {
    %c0_i32 = arith.constant 0 : i32
    %c0_i32_0 = arith.constant 0 : i32
    %c0_i32_1 = arith.constant 0 : i32
    return %arg0, %c0_i32, %c0_i32_0 : i32, i32, i32
  }
  func.func @transform_1(%arg0: i32) -> (i32, i32, i32) {
    %c0_i32 = arith.constant 0 : i32
    %c0_i32_0 = arith.constant 0 : i32
    %c0_i32_1 = arith.constant 0 : i32
    return %arg0, %c0_i32, %c0_i32_0 : i32, i32, i32
  }
  func.func @transform_2(%arg0: i32) -> (i32, i32, i32) {
    %c0_i32 = arith.constant 0 : i32
    %c0_i32_0 = arith.constant 0 : i32
    %c0_i32_1 = arith.constant 0 : i32
    return %arg0, %c0_i32, %c0_i32_0 : i32, i32, i32
  }
  func.func @transform_3(%arg0: i32) -> (i32, i32) {
    %c0_i32 = arith.constant 0 : i32
    %c0_i32_0 = arith.constant 0 : i32
    return %c0_i32, %arg0 : i32, i32
  }
}

</mosaic_0001>

<llo_original>
// kernel: tpu_custom_call.1
$region0: #{tpu_custom_call.1}
  #allocation0 [shape = 'u32[]', space=smem, size = 0x4, offset = 0x4, fixed_abs, tag = 'smem constant byte address 0x4 - core index']
  #allocation1 [shape = 'u32[72,128]{1,0:T(1,128)}', space=vmem, size = 0x9000, scoped, tag = 'internal scratch']
  %s0 = inlined_call_operand.hbm [shape: bf16[4,16,768], index: 0, kind: input, shape index: {}]
  %s1 = inlined_call_operand.hbm [shape: bf16[4,768,384], index: 1, kind: input, shape index: {}]
  %s2 = inlined_call_operand.hbm [shape: bf16[4,384,512], index: 2, kind: input, shape index: {}]
  %s3 = inlined_call_operand.hbm [shape: f32[16,2048], index: 3, kind: output, shape index: {}]
  %s4 = sld [smem:[#allocation0]]
  $region57: #{tpu_custom_call.1} parent=0
    _
  %s6 = ssub.s32 1, %s4
  %s7 = scalar_select 0, %s6, %s4
  $region1: #{tpu_custom_call.1} parent=0
    #allocation2 [shape = 'u8[49152]{0}', space=vmem, size = 0xc000, scoped, tag = 'input window, operand 0']
    #allocation3 [shape = 's32[2]{0}', space=sflag, size = 0x8, scoped, tag = 'scoped memory for tpu_custom_call.1']
    #allocation4 [shape = 's32[2]{0}', space=sflag, size = 0x8, scoped, tag = 'scoped memory for tpu_custom_call.1']
    #allocation5 [shape = 'u8[1179648]{0}', space=vmem, size = 0x120000, scoped, tag = 'input window, operand 1']
    #allocation6 [shape = 's32[2]{0}', space=sflag, size = 0x8, scoped, tag = 'scoped memory for tpu_custom_call.1']
    #allocation7 [shape = 'u8[786432]{0}', space=vmem, size = 0xc0000, scoped, tag = 'input window, operand 2']
    #allocation8 [shape = 'u8[65536]{0}', space=vmem, size = 0x10000, scoped, tag = 'output window, operand 0']
    %8 = vsyncpa [#allocation3], 0
    %s9 = scalar_lea.sflag [#allocation3], 1
    %10 = vsyncpa %s9, 0
    %11 = vsyncpa [#allocation6], 0
    %s12 = scalar_lea.sflag [#allocation6], 1
    %13 = vsyncpa %s12, 0
    %14 = vsyncpa [#allocation4], 0
    %s15 = scalar_lea.sflag [#allocation4], 1
    %16 = vsyncpa %s15, 0
    loop: start=0, step=1, limit=6
    $region2: #{tpu_custom_call.1} parent=1 // loop_pre_header
      _
    $region3: #{tpu_custom_call.1} parent=1 // loop_header
      %s18 = sphi 0, %s22
      %p19 = scmp.ge.s32.totalorder %s18, 6
      %s28 = sphi 0, %s30
      %s31 = sphi 0, %s28
      %s32 = sphi 0, %s31
      %s48 = sphi 0, %s32
      %s54 = sphi 0, %s56
      %s57 = sphi 0, %s54
      %s58 = sphi 0, %s57
      %s74 = sphi 0, %s58
      %s80 = sphi 0, %s82
      %s83 = sphi 0, %s80
      %s84 = sphi 0, %s83
      %s100 = sphi 0, %s84
      %s106 = sphi 0, %s108
      %s109 = sphi 0, %s106
      %s110 = sphi 0, %s109
      %s126 = sphi 0, %s110
    $region4: #{tpu_custom_call.1} parent=1 // loop_header_branch
      %21 = sbr.rel (%p19) target = $region8
    $region5: #{tpu_custom_call.1} parent=1 // loop_body
      %s23 = ssub.s32 %s18, 1
      %s24 = ssub.s32 %s18, 2
      %s25 = sadd.s32 %s18, 1
      %s26 = ssub.s32 %s18, %s25
      %p27 = scmp.eq.s32.totalorder %s26, 0
      %s29 = sadd.s32 %s28, 1
      %s30 = scalar_select %p27, %s28, %s29
      %p33 = pneg %p27
      %p34 = scmp.eq.s32.totalorder %s18, 3
      %p35 = por %p33, %p34
      %p36 = scmp.ne.s32.totalorder %s28, %s31
      %p37 = scmp.eq.s32.totalorder %s18, 0
      %p38 = por %p36, %p37
      %p39 = scmp.ne.s32.totalorder %s28, %s31
      %p40 = scmp.eq.s32.totalorder %s23, 3
      %p41 = por %p39, %p40
      %p42 = scmp.ne.s32.totalorder %s31, %s32
      %p43 = scmp.eq.s32.totalorder %s23, 0
      %p44 = por %p42, %p43
      %p45 = scmp.ne.s32.totalorder %s31, %s32
      %p46 = scmp.eq.s32.totalorder %s24, 3
      %p47 = por %p45, %p46
      %p49 = scmp.ne.s32.totalorder %s32, %s48
      %p50 = scmp.eq.s32.totalorder %s24, 0
      %p51 = por %p49, %p50
      %s52 = ssub.s32 %s18, %s25
      %p53 = scmp.eq.s32.totalorder %s52, 0
      %s55 = sadd.s32 %s54, 1
      %s56 = scalar_select %p53, %s54, %s55
      %p59 = pneg %p53
      %p60 = scmp.eq.s32.totalorder %s18, 3
      %p61 = por %p59, %p60
      %p62 = scmp.ne.s32.totalorder %s54, %s57
      %p63 = scmp.eq.s32.totalorder %s18, 0
      %p64 = por %p62, %p63
      %p65 = scmp.ne.s32.totalorder %s54, %s57
      %p66 = scmp.eq.s32.totalorder %s23, 3
      %p67 = por %p65, %p66
      %p68 = scmp.ne.s32.totalorder %s57, %s58
      %p69 = scmp.eq.s32.totalorder %s23, 0
      %p70 = por %p68, %p69
      %p71 = scmp.ne.s32.totalorder %s57, %s58
      %p72 = scmp.eq.s32.totalorder %s24, 3
      %p73 = por %p71, %p72
      %p75 = scmp.ne.s32.totalorder %s58, %s74
      %p76 = scmp.eq.s32.totalorder %s24, 0
      %p77 = por %p75, %p76
      %s78 = ssub.s32 %s18, %s25
      %p79 = scmp.eq.s32.totalorder %s78, 0
      %s81 = sadd.s32 %s80, 1
      %s82 = scalar_select %p79, %s80, %s81
      %p85 = pneg %p79
      %p86 = scmp.eq.s32.totalorder %s18, 3
      %p87 = por %p85, %p86
      %p88 = scmp.ne.s32.totalorder %s80, %s83
      %p89 = scmp.eq.s32.totalorder %s18, 0
      %p90 = por %p88, %p89
      %p91 = scmp.ne.s32.totalorder %s80, %s83
      %p92 = scmp.eq.s32.totalorder %s23, 3
      %p93 = por %p91, %p92
      %p94 = scmp.ne.s32.totalorder %s83, %s84
      %p95 = scmp.eq.s32.totalorder %s23, 0
      %p96 = por %p94, %p95
      %p97 = scmp.ne.s32.totalorder %s83, %s84
      %p98 = scmp.eq.s32.totalorder %s24, 3
      %p99 = por %p97, %p98
      %p101 = scmp.ne.s32.totalorder %s84, %s100
      %p102 = scmp.eq.s32.totalorder %s24, 0
      %p103 = por %p101, %p102
      %s104 = ssub.s32 %s18, %s25
      %p105 = scmp.eq.s32.totalorder %s104, 0
      %s107 = sadd.s32 %s106, 1
      %s108 = scalar_select %p105, %s106, %s107
      %p111 = pneg %p105
      %p112 = scmp.eq.s32.totalorder %s18, 3
      %p113 = por %p111, %p112
      %p114 = scmp.ne.s32.totalorder %s106, %s109
      %p115 = scmp.eq.s32.totalorder %s18, 0
      %p116 = por %p114, %p115
      %p117 = scmp.ne.s32.totalorder %s106, %s109
      %p118 = scmp.eq.s32.totalorder %s23, 3
      %p119 = por %p117, %p118
      %p120 = scmp.ne.s32.totalorder %s109, %s110
      %p121 = scmp.eq.s32.totalorder %s23, 0
      %p122 = por %p120, %p121
      %p123 = scmp.ne.s32.totalorder %s109, %s110
      %p124 = scmp.eq.s32.totalorder %s24, 3
      %p125 = por %p123, %p124
      %p127 = scmp.ne.s32.totalorder %s110, %s126
      %p128 = scmp.eq.s32.totalorder %s24, 0
      %p129 = por %p127, %p128
      %p130 = scmp.le.s32.totalorder 1, %s18
      %p131 = scmp.lt.s32.totalorder %s18, 5
      %p132 = pnand %p130, %p131
      %p133 = pneg %p132
      // Predicated region
      $region9: #{tpu_custom_call.1} parent=5 // pred_check
        _
      $region10: #{tpu_custom_call.1} parent=5 // pred_check_branch
        %135 = sbr.rel (%p132) target = $region12
      $region11: #{tpu_custom_call.1} parent=5 // pred_region
        %s136 = ssub.s32 %s18, 1
      $region12: #{tpu_custom_call.1} parent=5 // pred_fallthru
        _
      %p137 = scmp.lt.s32.totalorder %s18, 4
      // Predicated region
      $region13: #{tpu_custom_call.1} parent=5 // pred_check
        %p138 = pneg %p137
      $region14: #{tpu_custom_call.1} parent=5 // pred_check_branch
        %140 = sbr.rel (%p138) target = $region16
      $region15: #{tpu_custom_call.1} parent=5 // pred_region
        // Predicated region
        $region17: #{tpu_custom_call.1} parent=15 // pred_check
          %p141 = pneg %p38
        $region18: #{tpu_custom_call.1} parent=15 // pred_check_branch
          %143 = sbr.rel (%p141) target = $region20
        $region19: #{tpu_custom_call.1} parent=15 // pred_region
          %s144 = sand.u32 %s28, 1
          %s145 = scalar_lea.sflag [#allocation3], %s144
          %s146 = sand.u32 %s28, 1
          %s147 = smul.addr %s146, 48
          %s148 = scalar_lea.vmem [#allocation2], %s147
          %150 = vsyncadd %s145, 0
          %s151 = smul.addr %s18, 12
          %s152 = smul.addr %s151, 4
          %s153 = scalar_lea.hbm %s0, %s152
          %s154 = sshll.u32 %s153, 4
          %s155 = int_to_ptr.hbm [resolvable:$true] %s154
          %s156 = sshll.u32 %s148, 4
          %s157 = int_to_ptr.vmem [resolvable:$true] %s156
          %162 = dma.hbm_to_vmem [thread:$0]  %s155, 768, %s157, %s145, 384, 384, 24
        $region20: #{tpu_custom_call.1} parent=15 // pred_fallthru
          _
        // Predicated region
        $region21: #{tpu_custom_call.1} parent=15 // pred_check
          %p163 = pneg %p64
        $region22: #{tpu_custom_call.1} parent=15 // pred_check_branch
          %165 = sbr.rel (%p163) target = $region24
        $region23: #{tpu_custom_call.1} parent=15 // pred_region
          %s166 = sand.u32 %s18, 1
          %s167 = scalar_lea.sflag [#allocation6], %s166
          %s168 = sand.u32 %s54, 1
          %s169 = smul.addr %s168, 1152
          %s170 = scalar_lea.vmem [#allocation5], %s169
          %172 = vsyncadd %s167, 0
          %s173 = smul.addr %s18, 288
          %s174 = smul.addr %s173, 4
          %s175 = scalar_lea.hbm %s1, %s174
          %s176 = sshll.u32 %s175, 4
          %s177 = int_to_ptr.hbm [resolvable:$true] %s176
          %s178 = sshll.u32 %s170, 4
          %s179 = int_to_ptr.vmem [resolvable:$true] %s178
          %184 = dma.hbm_to_vmem [thread:$0]  %s177, 18432, %s179, %s167, 192, 192, 12
        $region24: #{tpu_custom_call.1} parent=15 // pred_fallthru
          _
        // Predicated region
        $region25: #{tpu_custom_call.1} parent=15 // pred_check
          %p185 = pneg %p90
        $region26: #{tpu_custom_call.1} parent=15 // pred_check_branch
          %187 = sbr.rel (%p185) target = $region28
        $region27: #{tpu_custom_call.1} parent=15 // pred_region
          %s188 = sand.u32 %s18, 1
          %s189 = scalar_lea.sflag [#allocation6], %s188
          %s190 = sand.u32 %s80, 1
          %s191 = smul.addr %s190, 768
          %s192 = scalar_lea.vmem [#allocation7], %s191
          %194 = vsyncadd %s189, 0
          %s195 = smul.addr %s18, 192
          %s196 = smul.addr %s195, 4
          %s197 = scalar_lea.hbm %s2, %s196
          %s198 = sshll.u32 %s197, 4
          %s199 = int_to_ptr.hbm [resolvable:$true] %s198
          %s200 = sshll.u32 %s192, 4
          %s201 = int_to_ptr.vmem [resolvable:$true] %s200
          %206 = dma.hbm_to_vmem [thread:$0]  %s199, 12288, %s201, %s189, 256, 256, 16
        $region28: #{tpu_custom_call.1} parent=15 // pred_fallthru
          _
      $region16: #{tpu_custom_call.1} parent=5 // pred_fallthru
        _
      %p207 = scmp.le.s32.totalorder 1, %s18
      %p208 = scmp.lt.s32.totalorder %s18, 5
      %p209 = pnand %p207, %p208
      %p210 = pneg %p209
      // Predicated region
      $region29: #{tpu_custom_call.1} parent=5 // pred_check
        _
      $region30: #{tpu_custom_call.1} parent=5 // pred_check_branch
        %212 = sbr.rel (%p209) target = $region32
      $region31: #{tpu_custom_call.1} parent=5 // pred_region
        %s213 = ssub.s32 %s18, 1
        %s214 = sand.u32 %s31, 1
        %s215 = scalar_lea.sflag [#allocation3], %s214
        %s216 = sand.u32 %s31, 1
        %s217 = smul.addr %s216, 48
        %s218 = scalar_lea.vmem [#allocation2], %s217
        // Predicated region
        $region33: #{tpu_custom_call.1} parent=31 // pred_check
          %p219 = pneg %p44
        $region34: #{tpu_custom_call.1} parent=31 // pred_check_branch
          %221 = sbr.rel (%p219) target = $region36
        $region35: #{tpu_custom_call.1} parent=31 // pred_region
          %223 = dma.done %s215, 768
        $region36: #{tpu_custom_call.1} parent=31 // pred_fallthru
          _
        %s224 = sand.u32 %s23, 1
        %s225 = scalar_lea.sflag [#allocation6], %s224
        %s226 = sand.u32 %s57, 1
        %s227 = smul.addr %s226, 1152
        %s228 = scalar_lea.vmem [#allocation5], %s227
        // Predicated region
        $region37: #{tpu_custom_call.1} parent=31 // pred_check
          %p229 = pneg %p70
        $region38: #{tpu_custom_call.1} parent=31 // pred_check_branch
          %231 = sbr.rel (%p229) target = $region40
        $region39: #{tpu_custom_call.1} parent=31 // pred_region
          %233 = dma.done %s225, 18432
        $region40: #{tpu_custom_call.1} parent=31 // pred_fallthru
          _
        %s234 = sand.u32 %s23, 1
        %s235 = scalar_lea.sflag [#allocation6], %s234
        %s236 = sand.u32 %s83, 1
        %s237 = smul.addr %s236, 768
        %s238 = scalar_lea.vmem [#allocation7], %s237
        // Predicated region
        $region41: #{tpu_custom_call.1} parent=31 // pred_check
          %p239 = pneg %p96
        $region42: #{tpu_custom_call.1} parent=31 // pred_check_branch
          %241 = sbr.rel (%p239) target = $region44
        $region43: #{tpu_custom_call.1} parent=31 // pred_region
          %243 = dma.done %s235, 12288
        $region44: #{tpu_custom_call.1} parent=31 // pred_fallthru
          _
        %s244 = sand.u32 %s31, 1
        %s245 = scalar_lea.sflag [#allocation3], %s244
        %s246 = sand.u32 %s31, 1
        %s247 = smul.addr %s246, 48
        %s248 = scalar_lea.vmem [#allocation2], %s247
        %p249 = pneg %p44
        %p250 = pneg %p41
        %s251 = sand.u32 %s23, 1
        %s252 = scalar_lea.sflag [#allocation6], %s251
        %s253 = sand.u32 %s57, 1
        %s254 = smul.addr %s253, 1152
        %s255 = scalar_lea.vmem [#allocation5], %s254
        %p256 = pneg %p70
        %p257 = pneg %p67
        %s258 = sand.u32 %s23, 1
        %s259 = scalar_lea.sflag [#allocation6], %s258
        %s260 = sand.u32 %s83, 1
        %s261 = smul.addr %s260, 768
        %s262 = scalar_lea.vmem [#allocation7], %s261
        %p263 = pneg %p96
        %p264 = pneg %p93
        %p265 = pneg %p122
        %p266 = pneg %p119
        %s267 = sand.u32 %s109, 1
        %s268 = scalar_lea.sflag [#allocation4], %s267
        %s269 = sand.u32 %s109, 1
        %s270 = smul.addr %s269, 64
        %s271 = scalar_lea.vmem [#allocation8], %s270
        %s272 = smul.u32 4, %s23
        %v273 = vld [vmem:[%s218] sm:$0xff]
        %v274 = vld [vmem:[%s218 + $0x8] sm:$0xff]
        %v275 = vld [vmem:[%s218 + $0x10] sm:$0xff]
        %v276 = vld [vmem:[%s218 + $0x18] sm:$0xff]
        %v277 = vld [vmem:[%s218 + $0x20] sm:$0xff]
        %v278 = vld [vmem:[%s218 + $0x28] sm:$0xff]
        %v279 = vld [vmem:[%s228] sm:$0xff]
        %v280 = vld [vmem:[%s228 + $0x8] sm:$0xf]
        %v281 = vld [vmem:[%s228 + $0xc] sm:$0xff]
        %v282 = vld [vmem:[%s228 + $0x14] sm:$0xf]
        %v283 = vld [vmem:[%s228 + $0x18] sm:$0xff]
        %v284 = vld [vmem:[%s228 + $0x20] sm:$0xf]
        %v285 = vld [vmem:[%s228 + $0x24] sm:$0xff]
        %v286 = vld [vmem:[%s228 + $0x2c] sm:$0xf]
        %v287 = vld [vmem:[%s228 + $0x30] sm:$0xff]
        %v288 = vld [vmem:[%s228 + $0x38] sm:$0xf]
        %v289 = vld [vmem:[%s228 + $0x3c] sm:$0xff]
        %v290 = vld [vmem:[%s228 + $0x44] sm:$0xf]
        %v291 = vld [vmem:[%s228 + $0x48] sm:$0xff]
        %v292 = vld [vmem:[%s228 + $0x50] sm:$0xf]
        %v293 = vld [vmem:[%s228 + $0x54] sm:$0xff]
        %v294 = vld [vmem:[%s228 + $0x5c] sm:$0xf]
        %v295 = vld [vmem:[%s228 + $0x60] sm:$0xff]
        %v296 = vld [vmem:[%s228 + $0x68] sm:$0xf]
        %v297 = vld [vmem:[%s228 + $0x6c] sm:$0xff]
        %v298 = vld [vmem:[%s228 + $0x74] sm:$0xf]
        %v299 = vld [vmem:[%s228 + $0x78] sm:$0xff]
        %v300 = vld [vmem:[%s228 + $0x80] sm:$0xf]
        %v301 = vld [vmem:[%s228 + $0x84] sm:$0xff]
        %v302 = vld [vmem:[%s228 + $0x8c] sm:$0xf]
        %v303 = vld [vmem:[%s228 + $0x90] sm:$0xff]
        %v304 = vld [vmem:[%s228 + $0x98] sm:$0xf]
        %v305 = vld [vmem:[%s228 + $0x9c] sm:$0xff]
        %v306 = vld [vmem:[%s228 + $0xa4] sm:$0xf]
        %v307 = vld [vmem:[%s228 + $0xa8] sm:$0xff]
        %v308 = vld [vmem:[%s228 + $0xb0] sm:$0xf]
        %v309 = vld [vmem:[%s228 + $0xb4] sm:$0xff]
        %v310 = vld [vmem:[%s228 + $0xbc] sm:$0xf]
        %v311 = vld [vmem:[%s228 + $0xc0] sm:$0xff]
        %v312 = vld [vmem:[%s228 + $0xc8] sm:$0xf]
        %v313 = vld [vmem:[%s228 + $0xcc] sm:$0xff]
        %v314 = vld [vmem:[%s228 + $0xd4] sm:$0xf]
        %v315 = vld [vmem:[%s228 + $0xd8] sm:$0xff]
        %v316 = vld [vmem:[%s228 + $0xe0] sm:$0xf]
        %v317 = vld [vmem:[%s228 + $0xe4] sm:$0xff]
        %v318 = vld [vmem:[%s228 + $0xec] sm:$0xf]
        %v319 = vld [vmem:[%s228 + $0xf0] sm:$0xff]
        %v320 = vld [vmem:[%s228 + $0xf8] sm:$0xf]
        %v321 = vld [vmem:[%s228 + $0xfc] sm:$0xff]
        %v322 = vld [vmem:[%s228 + $0x104] sm:$0xf]
        %v323 = vld [vmem:[%s228 + $0x108] sm:$0xff]
        %v324 = vld [vmem:[%s228 + $0x110] sm:$0xf]
        %v325 = vld [vmem:[%s228 + $0x114] sm:$0xff]
        %v326 = vld [vmem:[%s228 + $0x11c] sm:$0xf]
        %v327 = vld [vmem:[%s228 + $0x120] sm:$0xff]
        %v328 = vld [vmem:[%s228 + $0x128] sm:$0xf]
        %v329 = vld [vmem:[%s228 + $0x12c] sm:$0xff]
        %v330 = vld [vmem:[%s228 + $0x134] sm:$0xf]
        %v331 = vld [vmem:[%s228 + $0x138] sm:$0xff]
        %v332 = vld [vmem:[%s228 + $0x140] sm:$0xf]
        %v333 = vld [vmem:[%s228 + $0x144] sm:$0xff]
        %v334 = vld [vmem:[%s228 + $0x14c] sm:$0xf]
        %v335 = vld [vmem:[%s228 + $0x150] sm:$0xff]
        %v336 = vld [vmem:[%s228 + $0x158] sm:$0xf]
        %v337 = vld [vmem:[%s228 + $0x15c] sm:$0xff]
        %v338 = vld [vmem:[%s228 + $0x164] sm:$0xf]
        %v339 = vld [vmem:[%s228 + $0x168] sm:$0xff]
        %v340 = vld [vmem:[%s228 + $0x170] sm:$0xf]
        %v341 = vld [vmem:[%s228 + $0x174] sm:$0xff]
        %v342 = vld [vmem:[%s228 + $0x17c] sm:$0xf]
        %v343 = vld [vmem:[%s228 + $0x180] sm:$0xff]
        %v344 = vld [vmem:[%s228 + $0x188] sm:$0xf]
        %v345 = vld [vmem:[%s228 + $0x18c] sm:$0xff]
        %v346 = vld [vmem:[%s228 + $0x194] sm:$0xf]
        %v347 = vld [vmem:[%s228 + $0x198] sm:$0xff]
        %v348 = vld [vmem:[%s228 + $0x1a0] sm:$0xf]
        %v349 = vld [vmem:[%s228 + $0x1a4] sm:$0xff]
        %v350 = vld [vmem:[%s228 + $0x1ac] sm:$0xf]
        %v351 = vld [vmem:[%s228 + $0x1b0] sm:$0xff]
        %v352 = vld [vmem:[%s228 + $0x1b8] sm:$0xf]
        %v353 = vld [vmem:[%s228 + $0x1bc] sm:$0xff]
        %v354 = vld [vmem:[%s228 + $0x1c4] sm:$0xf]
        %v355 = vld [vmem:[%s228 + $0x1c8] sm:$0xff]
        %v356 = vld [vmem:[%s228 + $0x1d0] sm:$0xf]
        %v357 = vld [vmem:[%s228 + $0x1d4] sm:$0xff]
        %v358 = vld [vmem:[%s228 + $0x1dc] sm:$0xf]
        %v359 = vld [vmem:[%s228 + $0x1e0] sm:$0xff]
        %v360 = vld [vmem:[%s228 + $0x1e8] sm:$0xf]
        %v361 = vld [vmem:[%s228 + $0x1ec] sm:$0xff]
        %v362 = vld [vmem:[%s228 + $0x1f4] sm:$0xf]
        %v363 = vld [vmem:[%s228 + $0x1f8] sm:$0xff]
        %v364 = vld [vmem:[%s228 + $0x200] sm:$0xf]
        %v365 = vld [vmem:[%s228 + $0x204] sm:$0xff]
        %v366 = vld [vmem:[%s228 + $0x20c] sm:$0xf]
        %v367 = vld [vmem:[%s228 + $0x210] sm:$0xff]
        %v368 = vld [vmem:[%s228 + $0x218] sm:$0xf]
        %v369 = vld [vmem:[%s228 + $0x21c] sm:$0xff]
        %v370 = vld [vmem:[%s228 + $0x224] sm:$0xf]
        %v371 = vld [vmem:[%s228 + $0x228] sm:$0xff]
        %v372 = vld [vmem:[%s228 + $0x230] sm:$0xf]
        %v373 = vld [vmem:[%s228 + $0x234] sm:$0xff]
        %v374 = vld [vmem:[%s228 + $0x23c] sm:$0xf]
        %v375 = vld [vmem:[%s228 + $0x240] sm:$0xff]
        %v376 = vld [vmem:[%s228 + $0x248] sm:$0xf]
        %v377 = vld [vmem:[%s228 + $0x24c] sm:$0xff]
        %v378 = vld [vmem:[%s228 + $0x254] sm:$0xf]
        %v379 = vld [vmem:[%s228 + $0x258] sm:$0xff]
        %v380 = vld [vmem:[%s228 + $0x260] sm:$0xf]
        %v381 = vld [vmem:[%s228 + $0x264] sm:$0xff]
        %v382 = vld [vmem:[%s228 + $0x26c] sm:$0xf]
        %v383 = vld [vmem:[%s228 + $0x270] sm:$0xff]
        %v384 = vld [vmem:[%s228 + $0x278] sm:$0xf]
        %v385 = vld [vmem:[%s228 + $0x27c] sm:$0xff]
        %v386 = vld [vmem:[%s228 + $0x284] sm:$0xf]
        %v387 = vld [vmem:[%s228 + $0x288] sm:$0xff]
        %v388 = vld [vmem:[%s228 + $0x290] sm:$0xf]
        %v389 = vld [vmem:[%s228 + $0x294] sm:$0xff]
        %v390 = vld [vmem:[%s228 + $0x29c] sm:$0xf]
        %v391 = vld [vmem:[%s228 + $0x2a0] sm:$0xff]
        %v392 = vld [vmem:[%s228 + $0x2a8] sm:$0xf]
        %v393 = vld [vmem:[%s228 + $0x2ac] sm:$0xff]
        %v394 = vld [vmem:[%s228 + $0x2b4] sm:$0xf]
        %v395 = vld [vmem:[%s228 + $0x2b8] sm:$0xff]
        %v396 = vld [vmem:[%s228 + $0x2c0] sm:$0xf]
        %v397 = vld [vmem:[%s228 + $0x2c4] sm:$0xff]
        %v398 = vld [vmem:[%s228 + $0x2cc] sm:$0xf]
        %v399 = vld [vmem:[%s228 + $0x2d0] sm:$0xff]
        %v400 = vld [vmem:[%s228 + $0x2d8] sm:$0xf]
        %v401 = vld [vmem:[%s228 + $0x2dc] sm:$0xff]
        %v402 = vld [vmem:[%s228 + $0x2e4] sm:$0xf]
        %v403 = vld [vmem:[%s228 + $0x2e8] sm:$0xff]
        %v404 = vld [vmem:[%s228 + $0x2f0] sm:$0xf]
        %v405 = vld [vmem:[%s228 + $0x2f4] sm:$0xff]
        %v406 = vld [vmem:[%s228 + $0x2fc] sm:$0xf]
        %v407 = vld [vmem:[%s228 + $0x300] sm:$0xff]
        %v408 = vld [vmem:[%s228 + $0x308] sm:$0xf]
        %v409 = vld [vmem:[%s228 + $0x30c] sm:$0xff]
        %v410 = vld [vmem:[%s228 + $0x314] sm:$0xf]
        %v411 = vld [vmem:[%s228 + $0x318] sm:$0xff]
        %v412 = vld [vmem:[%s228 + $0x320] sm:$0xf]
        %v413 = vld [vmem:[%s228 + $0x324] sm:$0xff]
        %v414 = vld [vmem:[%s228 + $0x32c] sm:$0xf]
        %v415 = vld [vmem:[%s228 + $0x330] sm:$0xff]
        %v416 = vld [vmem:[%s228 + $0x338] sm:$0xf]
        %v417 = vld [vmem:[%s228 + $0x33c] sm:$0xff]
        %v418 = vld [vmem:[%s228 + $0x344] sm:$0xf]
        %v419 = vld [vmem:[%s228 + $0x348] sm:$0xff]
        %v420 = vld [vmem:[%s228 + $0x350] sm:$0xf]
        %v421 = vld [vmem:[%s228 + $0x354] sm:$0xff]
        %v422 = vld [vmem:[%s228 + $0x35c] sm:$0xf]
        %v423 = vld [vmem:[%s228 + $0x360] sm:$0xff]
        %v424 = vld [vmem:[%s228 + $0x368] sm:$0xf]
        %v425 = vld [vmem:[%s228 + $0x36c] sm:$0xff]
        %v426 = vld [vmem:[%s228 + $0x374] sm:$0xf]
        %v427 = vld [vmem:[%s228 + $0x378] sm:$0xff]
        %v428 = vld [vmem:[%s228 + $0x380] sm:$0xf]
        %v429 = vld [vmem:[%s228 + $0x384] sm:$0xff]
        %v430 = vld [vmem:[%s228 + $0x38c] sm:$0xf]
        %v431 = vld [vmem:[%s228 + $0x390] sm:$0xff]
        %v432 = vld [vmem:[%s228 + $0x398] sm:$0xf]
        %v433 = vld [vmem:[%s228 + $0x39c] sm:$0xff]
        %v434 = vld [vmem:[%s228 + $0x3a4] sm:$0xf]
        %v435 = vld [vmem:[%s228 + $0x3a8] sm:$0xff]
        %v436 = vld [vmem:[%s228 + $0x3b0] sm:$0xf]
        %v437 = vld [vmem:[%s228 + $0x3b4] sm:$0xff]
        %v438 = vld [vmem:[%s228 + $0x3bc] sm:$0xf]
        %v439 = vld [vmem:[%s228 + $0x3c0] sm:$0xff]
        %v440 = vld [vmem:[%s228 + $0x3c8] sm:$0xf]
        %v441 = vld [vmem:[%s228 + $0x3cc] sm:$0xff]
        %v442 = vld [vmem:[%s228 + $0x3d4] sm:$0xf]
        %v443 = vld [vmem:[%s228 + $0x3d8] sm:$0xff]
        %v444 = vld [vmem:[%s228 + $0x3e0] sm:$0xf]
        %v445 = vld [vmem:[%s228 + $0x3e4] sm:$0xff]
        %v446 = vld [vmem:[%s228 + $0x3ec] sm:$0xf]
        %v447 = vld [vmem:[%s228 + $0x3f0] sm:$0xff]
        %v448 = vld [vmem:[%s228 + $0x3f8] sm:$0xf]
        %v449 = vld [vmem:[%s228 + $0x3fc] sm:$0xff]
        %v450 = vld [vmem:[%s228 + $0x404] sm:$0xf]
        %v451 = vld [vmem:[%s228 + $0x408] sm:$0xff]
        %v452 = vld [vmem:[%s228 + $0x410] sm:$0xf]
        %v453 = vld [vmem:[%s228 + $0x414] sm:$0xff]
        %v454 = vld [vmem:[%s228 + $0x41c] sm:$0xf]
        %v455 = vld [vmem:[%s228 + $0x420] sm:$0xff]
        %v456 = vld [vmem:[%s228 + $0x428] sm:$0xf]
        %v457 = vld [vmem:[%s228 + $0x42c] sm:$0xff]
        %v458 = vld [vmem:[%s228 + $0x434] sm:$0xf]
        %v459 = vld [vmem:[%s228 + $0x438] sm:$0xff]
        %v460 = vld [vmem:[%s228 + $0x440] sm:$0xf]
        %v461 = vld [vmem:[%s228 + $0x444] sm:$0xff]
        %v462 = vld [vmem:[%s228 + $0x44c] sm:$0xf]
        %v463 = vld [vmem:[%s228 + $0x450] sm:$0xff]
        %v464 = vld [vmem:[%s228 + $0x458] sm:$0xf]
        %v465 = vld [vmem:[%s228 + $0x45c] sm:$0xff]
        %v466 = vld [vmem:[%s228 + $0x464] sm:$0xf]
        %v467 = vld [vmem:[%s228 + $0x468] sm:$0xff]
        %v468 = vld [vmem:[%s228 + $0x470] sm:$0xf]
        %v469 = vld [vmem:[%s228 + $0x474] sm:$0xff]
        %v470 = vld [vmem:[%s228 + $0x47c] sm:$0xf]
        %v477 = vunpack.c.l.b16 %v273
        %v478 = vunpack.c.h.b16 %v273
        %v479 = vunpack.c.l.b16 %v274
        %v480 = vunpack.c.h.b16 %v274
        %v481 = vunpack.c.l.b16 %v275
        %v482 = vunpack.c.h.b16 %v275
        %v483 = vunpack.c.l.b16 %v276
        %v484 = vunpack.c.h.b16 %v276
        %v485 = vunpack.c.l.b16 %v277
        %v486 = vunpack.c.h.b16 %v277
        %v487 = vunpack.c.l.b16 %v278
        %v488 = vunpack.c.h.b16 %v278
        %v489 = vpack.c.b16 %v483, %v477
        %v490 = vpack.c.b16 %v484, %v478
        %v491 = vpack.c.b16 %v485, %v479
        %v492 = vpack.c.b16 %v486, %v480
        %v493 = vpack.c.b16 %v487, %v481
        %v494 = vpack.c.b16 %v488, %v482
        %v693 = vunpack.c.l.b16 %v279
        %v694 = vunpack.c.h.b16 %v279
        %v695 = vunpack.c.l.b16 %v280
        %v696 = vunpack.c.l.b16 %v281
        %v697 = vunpack.c.h.b16 %v281
        %v698 = vunpack.c.l.b16 %v282
        %v699 = vunpack.c.l.b16 %v283
        %v700 = vunpack.c.h.b16 %v283
        %v701 = vunpack.c.l.b16 %v284
        %v702 = vunpack.c.l.b16 %v285
        %v703 = vunpack.c.h.b16 %v285
        %v704 = vunpack.c.l.b16 %v286
        %v705 = vunpack.c.l.b16 %v287
        %v706 = vunpack.c.h.b16 %v287
        %v707 = vunpack.c.l.b16 %v288
        %v708 = vunpack.c.l.b16 %v289
        %v709 = vunpack.c.h.b16 %v289
        %v710 = vunpack.c.l.b16 %v290
        %v711 = vunpack.c.l.b16 %v291
        %v712 = vunpack.c.h.b16 %v291
        %v713 = vunpack.c.l.b16 %v292
        %v714 = vunpack.c.l.b16 %v293
        %v715 = vunpack.c.h.b16 %v293
        %v716 = vunpack.c.l.b16 %v294
        %v717 = vunpack.c.l.b16 %v295
        %v718 = vunpack.c.h.b16 %v295
        %v719 = vunpack.c.l.b16 %v296
        %v720 = vunpack.c.l.b16 %v297
        %v721 = vunpack.c.h.b16 %v297
        %v722 = vunpack.c.l.b16 %v298
        %v723 = vunpack.c.l.b16 %v299
        %v724 = vunpack.c.h.b16 %v299
        %v725 = vunpack.c.l.b16 %v300
        %v726 = vunpack.c.l.b16 %v301
        %v727 = vunpack.c.h.b16 %v301
        %v728 = vunpack.c.l.b16 %v302
        %v729 = vunpack.c.l.b16 %v303
        %v730 = vunpack.c.h.b16 %v303
        %v731 = vunpack.c.l.b16 %v304
        %v732 = vunpack.c.l.b16 %v305
        %v733 = vunpack.c.h.b16 %v305
        %v734 = vunpack.c.l.b16 %v306
        %v735 = vunpack.c.l.b16 %v307
        %v736 = vunpack.c.h.b16 %v307
        %v737 = vunpack.c.l.b16 %v308
        %v738 = vunpack.c.l.b16 %v309
        %v739 = vunpack.c.h.b16 %v309
        %v740 = vunpack.c.l.b16 %v310
        %v741 = vunpack.c.l.b16 %v311
        %v742 = vunpack.c.h.b16 %v311
        %v743 = vunpack.c.l.b16 %v312
        %v744 = vunpack.c.l.b16 %v313
        %v745 = vunpack.c.h.b16 %v313
        %v746 = vunpack.c.l.b16 %v314
        %v747 = vunpack.c.l.b16 %v315
        %v748 = vunpack.c.h.b16 %v315
        %v749 = vunpack.c.l.b16 %v316
        %v750 = vunpack.c.l.b16 %v317
        %v751 = vunpack.c.h.b16 %v317
        %v752 = vunpack.c.l.b16 %v318
        %v753 = vunpack.c.l.b16 %v319
        %v754 = vunpack.c.h.b16 %v319
        %v755 = vunpack.c.l.b16 %v320
        %v756 = vunpack.c.l.b16 %v321
        %v757 = vunpack.c.h.b16 %v321
        %v758 = vunpack.c.l.b16 %v322
        %v759 = vunpack.c.l.b16 %v323
        %v760 = vunpack.c.h.b16 %v323
        %v761 = vunpack.c.l.b16 %v324
        %v762 = vunpack.c.l.b16 %v325
        %v763 = vunpack.c.h.b16 %v325
        %v764 = vunpack.c.l.b16 %v326
        %v765 = vunpack.c.l.b16 %v327
        %v766 = vunpack.c.h.b16 %v327
        %v767 = vunpack.c.l.b16 %v328
        %v768 = vunpack.c.l.b16 %v329
        %v769 = vunpack.c.h.b16 %v329
        %v770 = vunpack.c.l.b16 %v330
        %v771 = vunpack.c.l.b16 %v331
        %v772 = vunpack.c.h.b16 %v331
        %v773 = vunpack.c.l.b16 %v332
        %v774 = vunpack.c.l.b16 %v333
        %v775 = vunpack.c.h.b16 %v333
        %v776 = vunpack.c.l.b16 %v334
        %v777 = vunpack.c.l.b16 %v335
        %v778 = vunpack.c.h.b16 %v335
        %v779 = vunpack.c.l.b16 %v336
        %v780 = vunpack.c.l.b16 %v337
        %v781 = vunpack.c.h.b16 %v337
        %v782 = vunpack.c.l.b16 %v338
        %v783 = vunpack.c.l.b16 %v339
        %v784 = vunpack.c.h.b16 %v339
        %v785 = vunpack.c.l.b16 %v340
        %v786 = vunpack.c.l.b16 %v341
        %v787 = vunpack.c.h.b16 %v341
        %v788 = vunpack.c.l.b16 %v342
        %v789 = vunpack.c.l.b16 %v343
        %v790 = vunpack.c.h.b16 %v343
        %v791 = vunpack.c.l.b16 %v344
        %v792 = vunpack.c.l.b16 %v345
        %v793 = vunpack.c.h.b16 %v345
        %v794 = vunpack.c.l.b16 %v346
        %v795 = vunpack.c.l.b16 %v347
        %v796 = vunpack.c.h.b16 %v347
        %v797 = vunpack.c.l.b16 %v348
        %v798 = vunpack.c.l.b16 %v349
        %v799 = vunpack.c.h.b16 %v349
        %v800 = vunpack.c.l.b16 %v350
        %v801 = vunpack.c.l.b16 %v351
        %v802 = vunpack.c.h.b16 %v351
        %v803 = vunpack.c.l.b16 %v352
        %v804 = vunpack.c.l.b16 %v353
        %v805 = vunpack.c.h.b16 %v353
        %v806 = vunpack.c.l.b16 %v354
        %v807 = vunpack.c.l.b16 %v355
        %v808 = vunpack.c.h.b16 %v355
        %v809 = vunpack.c.l.b16 %v356
        %v810 = vunpack.c.l.b16 %v357
        %v811 = vunpack.c.h.b16 %v357
        %v812 = vunpack.c.l.b16 %v358
        %v813 = vunpack.c.l.b16 %v359
        %v814 = vunpack.c.h.b16 %v359
        %v815 = vunpack.c.l.b16 %v360
        %v816 = vunpack.c.l.b16 %v361
        %v817 = vunpack.c.h.b16 %v361
        %v818 = vunpack.c.l.b16 %v362
        %v819 = vunpack.c.l.b16 %v363
        %v820 = vunpack.c.h.b16 %v363
        %v821 = vunpack.c.l.b16 %v364
        %v822 = vunpack.c.l.b16 %v365
        %v823 = vunpack.c.h.b16 %v365
        %v824 = vunpack.c.l.b16 %v366
        %v825 = vunpack.c.l.b16 %v367
        %v826 = vunpack.c.h.b16 %v367
        %v827 = vunpack.c.l.b16 %v368
        %v828 = vunpack.c.l.b16 %v369
        %v829 = vunpack.c.h.b16 %v369
        %v830 = vunpack.c.l.b16 %v370
        %v831 = vunpack.c.l.b16 %v371
        %v832 = vunpack.c.h.b16 %v371
        %v833 = vunpack.c.l.b16 %v372
        %v834 = vunpack.c.l.b16 %v373
        %v835 = vunpack.c.h.b16 %v373
        %v836 = vunpack.c.l.b16 %v374
        %v837 = vunpack.c.l.b16 %v375
        %v838 = vunpack.c.h.b16 %v375
        %v839 = vunpack.c.l.b16 %v376
        %v840 = vunpack.c.l.b16 %v377
        %v841 = vunpack.c.h.b16 %v377
        %v842 = vunpack.c.l.b16 %v378
        %v843 = vunpack.c.l.b16 %v379
        %v844 = vunpack.c.h.b16 %v379
        %v845 = vunpack.c.l.b16 %v380
        %v846 = vunpack.c.l.b16 %v381
        %v847 = vunpack.c.h.b16 %v381
        %v848 = vunpack.c.l.b16 %v382
        %v849 = vunpack.c.l.b16 %v383
        %v850 = vunpack.c.h.b16 %v383
        %v851 = vunpack.c.l.b16 %v384
        %v852 = vunpack.c.l.b16 %v385
        %v853 = vunpack.c.h.b16 %v385
        %v854 = vunpack.c.l.b16 %v386
        %v855 = vunpack.c.l.b16 %v387
        %v856 = vunpack.c.h.b16 %v387
        %v857 = vunpack.c.l.b16 %v388
        %v858 = vunpack.c.l.b16 %v389
        %v859 = vunpack.c.h.b16 %v389
        %v860 = vunpack.c.l.b16 %v390
        %v861 = vunpack.c.l.b16 %v391
        %v862 = vunpack.c.h.b16 %v391
        %v863 = vunpack.c.l.b16 %v392
        %v864 = vunpack.c.l.b16 %v393
        %v865 = vunpack.c.h.b16 %v393
        %v866 = vunpack.c.l.b16 %v394
        %v867 = vunpack.c.l.b16 %v395
        %v868 = vunpack.c.h.b16 %v395
        %v869 = vunpack.c.l.b16 %v396
        %v870 = vunpack.c.l.b16 %v397
        %v871 = vunpack.c.h.b16 %v397
        %v872 = vunpack.c.l.b16 %v398
        %v873 = vunpack.c.l.b16 %v399
        %v874 = vunpack.c.h.b16 %v399
        %v875 = vunpack.c.l.b16 %v400
        %v876 = vunpack.c.l.b16 %v401
        %v877 = vunpack.c.h.b16 %v401
        %v878 = vunpack.c.l.b16 %v402
        %v879 = vunpack.c.l.b16 %v403
        %v880 = vunpack.c.h.b16 %v403
        %v881 = vunpack.c.l.b16 %v404
        %v882 = vunpack.c.l.b16 %v405
        %v883 = vunpack.c.h.b16 %v405
        %v884 = vunpack.c.l.b16 %v406
        %v885 = vunpack.c.l.b16 %v407
        %v886 = vunpack.c.h.b16 %v407
        %v887 = vunpack.c.l.b16 %v408
        %v888 = vunpack.c.l.b16 %v409
        %v889 = vunpack.c.h.b16 %v409
        %v890 = vunpack.c.l.b16 %v410
        %v891 = vunpack.c.l.b16 %v411
        %v892 = vunpack.c.h.b16 %v411
        %v893 = vunpack.c.l.b16 %v412
        %v894 = vunpack.c.l.b16 %v413
        %v895 = vunpack.c.h.b16 %v413
        %v896 = vunpack.c.l.b16 %v414
        %v897 = vunpack.c.l.b16 %v415
        %v898 = vunpack.c.h.b16 %v415
        %v899 = vunpack.c.l.b16 %v416
        %v900 = vunpack.c.l.b16 %v417
        %v901 = vunpack.c.h.b16 %v417
        %v902 = vunpack.c.l.b16 %v418
        %v903 = vunpack.c.l.b16 %v419
        %v904 = vunpack.c.h.b16 %v419
        %v905 = vunpack.c.l.b16 %v420
        %v906 = vunpack.c.l.b16 %v421
        %v907 = vunpack.c.h.b16 %v421
        %v908 = vunpack.c.l.b16 %v422
        %v909 = vunpack.c.l.b16 %v423
        %v910 = vunpack.c.h.b16 %v423
        %v911 = vunpack.c.l.b16 %v424
        %v912 = vunpack.c.l.b16 %v425
        %v913 = vunpack.c.h.b16 %v425
        %v914 = vunpack.c.l.b16 %v426
        %v915 = vunpack.c.l.b16 %v427
        %v916 = vunpack.c.h.b16 %v427
        %v917 = vunpack.c.l.b16 %v428
        %v918 = vunpack.c.l.b16 %v429
        %v919 = vunpack.c.h.b16 %v429
        %v920 = vunpack.c.l.b16 %v430
        %v921 = vunpack.c.l.b16 %v431
        %v922 = vunpack.c.h.b16 %v431
        %v923 = vunpack.c.l.b16 %v432
        %v924 = vunpack.c.l.b16 %v433
        %v925 = vunpack.c.h.b16 %v433
        %v926 = vunpack.c.l.b16 %v434
        %v927 = vunpack.c.l.b16 %v435
        %v928 = vunpack.c.h.b16 %v435
        %v929 = vunpack.c.l.b16 %v436
        %v930 = vunpack.c.l.b16 %v437
        %v931 = vunpack.c.h.b16 %v437
        %v932 = vunpack.c.l.b16 %v438
        %v933 = vunpack.c.l.b16 %v439
        %v934 = vunpack.c.h.b16 %v439
        %v935 = vunpack.c.l.b16 %v440
        %v936 = vunpack.c.l.b16 %v441
        %v937 = vunpack.c.h.b16 %v441
        %v938 = vunpack.c.l.b16 %v442
        %v939 = vunpack.c.l.b16 %v443
        %v940 = vunpack.c.h.b16 %v443
        %v941 = vunpack.c.l.b16 %v444
        %v942 = vunpack.c.l.b16 %v445
        %v943 = vunpack.c.h.b16 %v445
        %v944 = vunpack.c.l.b16 %v446
        %v945 = vunpack.c.l.b16 %v447
        %v946 = vunpack.c.h.b16 %v447
        %v947 = vunpack.c.l.b16 %v448
        %v948 = vunpack.c.l.b16 %v449
        %v949 = vunpack.c.h.b16 %v449
        %v950 = vunpack.c.l.b16 %v450
        %v951 = vunpack.c.l.b16 %v451
        %v952 = vunpack.c.h.b16 %v451
        %v953 = vunpack.c.l.b16 %v452
        %v954 = vunpack.c.l.b16 %v453
        %v955 = vunpack.c.h.b16 %v453
        %v956 = vunpack.c.l.b16 %v454
        %v957 = vunpack.c.l.b16 %v455
        %v958 = vunpack.c.h.b16 %v455
        %v959 = vunpack.c.l.b16 %v456
        %v960 = vunpack.c.l.b16 %v457
        %v961 = vunpack.c.h.b16 %v457
        %v962 = vunpack.c.l.b16 %v458
        %v963 = vunpack.c.l.b16 %v459
        %v964 = vunpack.c.h.b16 %v459
        %v965 = vunpack.c.l.b16 %v460
        %v966 = vunpack.c.l.b16 %v461
        %v967 = vunpack.c.h.b16 %v461
        %v968 = vunpack.c.l.b16 %v462
        %v969 = vunpack.c.l.b16 %v463
        %v970 = vunpack.c.h.b16 %v463
        %v971 = vunpack.c.l.b16 %v464
        %v972 = vunpack.c.l.b16 %v465
        %v973 = vunpack.c.h.b16 %v465
        %v974 = vunpack.c.l.b16 %v466
        %v975 = vunpack.c.l.b16 %v467
        %v976 = vunpack.c.h.b16 %v467
        %v977 = vunpack.c.l.b16 %v468
        %v978 = vunpack.c.l.b16 %v469
        %v979 = vunpack.c.h.b16 %v469
        %v980 = vunpack.c.l.b16 %v470
        %v981 = vpack.c.b16 %v696, %v693
        %v982 = vpack.c.b16 %v697, %v694
        %v983 = vpack.c.b16 %v698, %v695
        %v984 = vpack.c.b16 %v702, %v699
        %v985 = vpack.c.b16 %v703, %v700
        %v986 = vpack.c.b16 %v704, %v701
        %v987 = vpack.c.b16 %v708, %v705
        %v988 = vpack.c.b16 %v709, %v706
        %v989 = vpack.c.b16 %v710, %v707
        %v990 = vpack.c.b16 %v714, %v711
        %v991 = vpack.c.b16 %v715, %v712
        %v992 = vpack.c.b16 %v716, %v713
        %v993 = vpack.c.b16 %v720, %v717
        %v994 = vpack.c.b16 %v721, %v718
        %v995 = vpack.c.b16 %v722, %v719
        %v996 = vpack.c.b16 %v726, %v723
        %v997 = vpack.c.b16 %v727, %v724
        %v998 = vpack.c.b16 %v728, %v725
        %v999 = vpack.c.b16 %v732, %v729
        %v1000 = vpack.c.b16 %v733, %v730
        %v1001 = vpack.c.b16 %v734, %v731
        %v1002 = vpack.c.b16 %v738, %v735
        %v1003 = vpack.c.b16 %v739, %v736
        %v1004 = vpack.c.b16 %v740, %v737
        %v1005 = vpack.c.b16 %v744, %v741
        %v1006 = vpack.c.b16 %v745, %v742
        %v1007 = vpack.c.b16 %v746, %v743
        %v1008 = vpack.c.b16 %v750, %v747
        %v1009 = vpack.c.b16 %v751, %v748
        %v1010 = vpack.c.b16 %v752, %v749
        %v1011 = vpack.c.b16 %v756, %v753
        %v1012 = vpack.c.b16 %v757, %v754
        %v1013 = vpack.c.b16 %v758, %v755
        %v1014 = vpack.c.b16 %v762, %v759
        %v1015 = vpack.c.b16 %v763, %v760
        %v1016 = vpack.c.b16 %v764, %v761
        %v1017 = vpack.c.b16 %v768, %v765
        %v1018 = vpack.c.b16 %v769, %v766
        %v1019 = vpack.c.b16 %v770, %v767
        %v1020 = vpack.c.b16 %v774, %v771
        %v1021 = vpack.c.b16 %v775, %v772
        %v1022 = vpack.c.b16 %v776, %v773
        %v1023 = vpack.c.b16 %v780, %v777
        %v1024 = vpack.c.b16 %v781, %v778
        %v1025 = vpack.c.b16 %v782, %v779
        %v1026 = vpack.c.b16 %v786, %v783
        %v1027 = vpack.c.b16 %v787, %v784
        %v1028 = vpack.c.b16 %v788, %v785
        %v1029 = vpack.c.b16 %v792, %v789
        %v1030 = vpack.c.b16 %v793, %v790
        %v1031 = vpack.c.b16 %v794, %v791
        %v1032 = vpack.c.b16 %v798, %v795
        %v1033 = vpack.c.b16 %v799, %v796
        %v1034 = vpack.c.b16 %v800, %v797
        %v1035 = vpack.c.b16 %v804, %v801
        %v1036 = vpack.c.b16 %v805, %v802
        %v1037 = vpack.c.b16 %v806, %v803
        %v1038 = vpack.c.b16 %v810, %v807
        %v1039 = vpack.c.b16 %v811, %v808
        %v1040 = vpack.c.b16 %v812, %v809
        %v1041 = vpack.c.b16 %v816, %v813
        %v1042 = vpack.c.b16 %v817, %v814
        %v1043 = vpack.c.b16 %v818, %v815
        %v1044 = vpack.c.b16 %v822, %v819
        %v1045 = vpack.c.b16 %v823, %v820
        %v1046 = vpack.c.b16 %v824, %v821
        %v1047 = vpack.c.b16 %v828, %v825
        %v1048 = vpack.c.b16 %v829, %v826
        %v1049 = vpack.c.b16 %v830, %v827
        %v1050 = vpack.c.b16 %v834, %v831
        %v1051 = vpack.c.b16 %v835, %v832
        %v1052 = vpack.c.b16 %v836, %v833
        %v1053 = vpack.c.b16 %v840, %v837
        %v1054 = vpack.c.b16 %v841, %v838
        %v1055 = vpack.c.b16 %v842, %v839
        %v1056 = vpack.c.b16 %v846, %v843
        %v1057 = vpack.c.b16 %v847, %v844
        %v1058 = vpack.c.b16 %v848, %v845
        %v1059 = vpack.c.b16 %v852, %v849
        %v1060 = vpack.c.b16 %v853, %v850
        %v1061 = vpack.c.b16 %v854, %v851
        %v1062 = vpack.c.b16 %v858, %v855
        %v1063 = vpack.c.b16 %v859, %v856
        %v1064 = vpack.c.b16 %v860, %v857
        %v1065 = vpack.c.b16 %v864, %v861
        %v1066 = vpack.c.b16 %v865, %v862
        %v1067 = vpack.c.b16 %v866, %v863
        %v1068 = vpack.c.b16 %v870, %v867
        %v1069 = vpack.c.b16 %v871, %v868
        %v1070 = vpack.c.b16 %v872, %v869
        %v1071 = vpack.c.b16 %v876, %v873
        %v1072 = vpack.c.b16 %v877, %v874
        %v1073 = vpack.c.b16 %v878, %v875
        %v1074 = vpack.c.b16 %v882, %v879
        %v1075 = vpack.c.b16 %v883, %v880
        %v1076 = vpack.c.b16 %v884, %v881
        %v1077 = vpack.c.b16 %v888, %v885
        %v1078 = vpack.c.b16 %v889, %v886
        %v1079 = vpack.c.b16 %v890, %v887
        %v1080 = vpack.c.b16 %v894, %v891
        %v1081 = vpack.c.b16 %v895, %v892
        %v1082 = vpack.c.b16 %v896, %v893
        %v1083 = vpack.c.b16 %v900, %v897
        %v1084 = vpack.c.b16 %v901, %v898
        %v1085 = vpack.c.b16 %v902, %v899
        %v1086 = vpack.c.b16 %v906, %v903
        %v1087 = vpack.c.b16 %v907, %v904
        %v1088 = vpack.c.b16 %v908, %v905
        %v1089 = vpack.c.b16 %v912, %v909
        %v1090 = vpack.c.b16 %v913, %v910
        %v1091 = vpack.c.b16 %v914, %v911
        %v1092 = vpack.c.b16 %v918, %v915
        %v1093 = vpack.c.b16 %v919, %v916
        %v1094 = vpack.c.b16 %v920, %v917
        %v1095 = vpack.c.b16 %v924, %v921
        %v1096 = vpack.c.b16 %v925, %v922
        %v1097 = vpack.c.b16 %v926, %v923
        %v1098 = vpack.c.b16 %v930, %v927
        %v1099 = vpack.c.b16 %v931, %v928
        %v1100 = vpack.c.b16 %v932, %v929
        %v1101 = vpack.c.b16 %v936, %v933
        %v1102 = vpack.c.b16 %v937, %v934
        %v1103 = vpack.c.b16 %v938, %v935
        %v1104 = vpack.c.b16 %v942, %v939
        %v1105 = vpack.c.b16 %v943, %v940
        %v1106 = vpack.c.b16 %v944, %v941
        %v1107 = vpack.c.b16 %v948, %v945
        %v1108 = vpack.c.b16 %v949, %v946
        %v1109 = vpack.c.b16 %v950, %v947
        %v1110 = vpack.c.b16 %v954, %v951
        %v1111 = vpack.c.b16 %v955, %v952
        %v1112 = vpack.c.b16 %v956, %v953
        %v1113 = vpack.c.b16 %v960, %v957
        %v1114 = vpack.c.b16 %v961, %v958
        %v1115 = vpack.c.b16 %v962, %v959
        %v1116 = vpack.c.b16 %v966, %v963
        %v1117 = vpack.c.b16 %v967, %v964
        %v1118 = vpack.c.b16 %v968, %v965
        %v1119 = vpack.c.b16 %v972, %v969
        %v1120 = vpack.c.b16 %v973, %v970
        %v1121 = vpack.c.b16 %v974, %v971
        %v1122 = vpack.c.b16 %v978, %v975
        %v1123 = vpack.c.b16 %v979, %v976
        %v1124 = vpack.c.b16 %v980, %v977
        %1269 = vmatpush.bf16.msra.mxu0 %v1002
        %1270 = vmatpush.bf16.msra.mxu0 %v999
        %1271 = vmatpush.bf16.msra.mxu0 %v996
        %1272 = vmatpush.bf16.msra.mxu0 %v993
        %1273 = vmatpush.bf16.msra.mxu0 %v990
        %1274 = vmatpush.bf16.msra.mxu0 %v987
        %1275 = vmatpush.bf16.msra.mxu0 %v984
        %1276 = vmatpush.bf16.msra.mxu0 %v981
        %1277 = vmatmul.bf16.gmra.mxu0 %v489
        %v1278 = vpop.f32.mrf.mxu0
        %v1279 = vadd.f32 0.0, %v1278
        %v1280 = vpop.f32.mrf.mxu0
        %v1281 = vadd.f32 0.0, %v1280
        %1282 = vdwg.mxu0
        %1283 = vmatpush.bf16.msra.mxu0 %v1026
        %1284 = vmatpush.bf16.msra.mxu0 %v1023
        %1285 = vmatpush.bf16.msra.mxu0 %v1020
        %1286 = vmatpush.bf16.msra.mxu0 %v1017
        %1287 = vmatpush.bf16.msra.mxu0 %v1014
        %1288 = vmatpush.bf16.msra.mxu0 %v1011
        %1289 = vmatpush.bf16.msra.mxu0 %v1008
        %1290 = vmatpush.bf16.msra.mxu0 %v1005
        %1291 = vmatmul.bf16.gmra.mxu0 %v490
        %v1292 = vpop.f32.mrf.mxu0
        %v1293 = vadd.f32 %v1279, %v1292
        %v1294 = vpop.f32.mrf.mxu0
        %v1295 = vadd.f32 %v1281, %v1294
        %1296 = vdwg.mxu0
        %1297 = vmatpush.bf16.msra.mxu0 %v1050
        %1298 = vmatpush.bf16.msra.mxu0 %v1047
        %1299 = vmatpush.bf16.msra.mxu0 %v1044
        %1300 = vmatpush.bf16.msra.mxu0 %v1041
        %1301 = vmatpush.bf16.msra.mxu0 %v1038
        %1302 = vmatpush.bf16.msra.mxu0 %v1035
        %1303 = vmatpush.bf16.msra.mxu0 %v1032
        %1304 = vmatpush.bf16.msra.mxu0 %v1029
        %1305 = vmatmul.bf16.gmra.mxu0 %v491
        %v1306 = vpop.f32.mrf.mxu0
        %v1307 = vadd.f32 %v1293, %v1306
        %v1308 = vpop.f32.mrf.mxu0
        %v1309 = vadd.f32 %v1295, %v1308
        %1310 = vdwg.mxu0
        %1311 = vmatpush.bf16.msra.mxu0 %v1074
        %1312 = vmatpush.bf16.msra.mxu0 %v1071
        %1313 = vmatpush.bf16.msra.mxu0 %v1068
        %1314 = vmatpush.bf16.msra.mxu0 %v1065
        %1315 = vmatpush.bf16.msra.mxu0 %v1062
        %1316 = vmatpush.bf16.msra.mxu0 %v1059
        %1317 = vmatpush.bf16.msra.mxu0 %v1056
        %1318 = vmatpush.bf16.msra.mxu0 %v1053
        %1319 = vmatmul.bf16.gmra.mxu0 %v492
        %v1320 = vpop.f32.mrf.mxu0
        %v1321 = vadd.f32 %v1307, %v1320
        %v1322 = vpop.f32.mrf.mxu0
        %v1323 = vadd.f32 %v1309, %v1322
        %1324 = vdwg.mxu0
        %1325 = vmatpush.bf16.msra.mxu0 %v1098
        %1326 = vmatpush.bf16.msra.mxu0 %v1095
        %1327 = vmatpush.bf16.msra.mxu0 %v1092
        %1328 = vmatpush.bf16.msra.mxu0 %v1089
        %1329 = vmatpush.bf16.msra.mxu0 %v1086
        %1330 = vmatpush.bf16.msra.mxu0 %v1083
        %1331 = vmatpush.bf16.msra.mxu0 %v1080
        %1332 = vmatpush.bf16.msra.mxu0 %v1077
        %1333 = vmatmul.bf16.gmra.mxu0 %v493
        %v1334 = vpop.f32.mrf.mxu0
        %v1335 = vadd.f32 %v1321, %v1334
        %v1336 = vpop.f32.mrf.mxu0
        %v1337 = vadd.f32 %v1323, %v1336
        %1338 = vdwg.mxu0
        %1339 = vmatpush.bf16.msra.mxu0 %v1122
        %1340 = vmatpush.bf16.msra.mxu0 %v1119
        %1341 = vmatpush.bf16.msra.mxu0 %v1116
        %1342 = vmatpush.bf16.msra.mxu0 %v1113
        %1343 = vmatpush.bf16.msra.mxu0 %v1110
        %1344 = vmatpush.bf16.msra.mxu0 %v1107
        %1345 = vmatpush.bf16.msra.mxu0 %v1104
        %1346 = vmatpush.bf16.msra.mxu0 %v1101
        %1347 = vmatmul.bf16.gmra.mxu0 %v494
        %v1348 = vpop.f32.mrf.mxu0
        %v1349 = vadd.f32 %v1335, %v1348
        %v1350 = vpop.f32.mrf.mxu0
        %v1351 = vadd.f32 %v1337, %v1350
        %1352 = vdwg.mxu0
        %1353 = vmatpush.bf16.msra.mxu0 %v1003
        %1354 = vmatpush.bf16.msra.mxu0 %v1000
        %1355 = vmatpush.bf16.msra.mxu0 %v997
        %1356 = vmatpush.bf16.msra.mxu0 %v994
        %1357 = vmatpush.bf16.msra.mxu0 %v991
        %1358 = vmatpush.bf16.msra.mxu0 %v988
        %1359 = vmatpush.bf16.msra.mxu0 %v985
        %1360 = vmatpush.bf16.msra.mxu0 %v982
        %1361 = vmatmul.bf16.gmra.mxu0 %v489
        %v1362 = vpop.f32.mrf.mxu0
        %v1363 = vadd.f32 0.0, %v1362
        %v1364 = vpop.f32.mrf.mxu0
        %v1365 = vadd.f32 0.0, %v1364
        %1366 = vdwg.mxu0
        %1367 = vmatpush.bf16.msra.mxu0 %v1027
        %1368 = vmatpush.bf16.msra.mxu0 %v1024
        %1369 = vmatpush.bf16.msra.mxu0 %v1021
        %1370 = vmatpush.bf16.msra.mxu0 %v1018
        %1371 = vmatpush.bf16.msra.mxu0 %v1015
        %1372 = vmatpush.bf16.msra.mxu0 %v1012
        %1373 = vmatpush.bf16.msra.mxu0 %v1009
        %1374 = vmatpush.bf16.msra.mxu0 %v1006
        %1375 = vmatmul.bf16.gmra.mxu0 %v490
        %v1376 = vpop.f32.mrf.mxu0
        %v1377 = vadd.f32 %v1363, %v1376
        %v1378 = vpop.f32.mrf.mxu0
        %v1379 = vadd.f32 %v1365, %v1378
        %1380 = vdwg.mxu0
        %1381 = vmatpush.bf16.msra.mxu0 %v1051
        %1382 = vmatpush.bf16.msra.mxu0 %v1048
        %1383 = vmatpush.bf16.msra.mxu0 %v1045
        %1384 = vmatpush.bf16.msra.mxu0 %v1042
        %1385 = vmatpush.bf16.msra.mxu0 %v1039
        %1386 = vmatpush.bf16.msra.mxu0 %v1036
        %1387 = vmatpush.bf16.msra.mxu0 %v1033
        %1388 = vmatpush.bf16.msra.mxu0 %v1030
        %1389 = vmatmul.bf16.gmra.mxu0 %v491
        %v1390 = vpop.f32.mrf.mxu0
        %v1391 = vadd.f32 %v1377, %v1390
        %v1392 = vpop.f32.mrf.mxu0
        %v1393 = vadd.f32 %v1379, %v1392
        %1394 = vdwg.mxu0
        %1395 = vmatpush.bf16.msra.mxu0 %v1075
        %1396 = vmatpush.bf16.msra.mxu0 %v1072
        %1397 = vmatpush.bf16.msra.mxu0 %v1069
        %1398 = vmatpush.bf16.msra.mxu0 %v1066
        %1399 = vmatpush.bf16.msra.mxu0 %v1063
        %1400 = vmatpush.bf16.msra.mxu0 %v1060
        %1401 = vmatpush.bf16.msra.mxu0 %v1057
        %1402 = vmatpush.bf16.msra.mxu0 %v1054
        %1403 = vmatmul.bf16.gmra.mxu0 %v492
        %v1404 = vpop.f32.mrf.mxu0
        %v1405 = vadd.f32 %v1391, %v1404
        %v1406 = vpop.f32.mrf.mxu0
        %v1407 = vadd.f32 %v1393, %v1406
        %1408 = vdwg.mxu0
        %1409 = vmatpush.bf16.msra.mxu0 %v1099
        %1410 = vmatpush.bf16.msra.mxu0 %v1096
        %1411 = vmatpush.bf16.msra.mxu0 %v1093
        %1412 = vmatpush.bf16.msra.mxu0 %v1090
        %1413 = vmatpush.bf16.msra.mxu0 %v1087
        %1414 = vmatpush.bf16.msra.mxu0 %v1084
        %1415 = vmatpush.bf16.msra.mxu0 %v1081
        %1416 = vmatpush.bf16.msra.mxu0 %v1078
        %1417 = vmatmul.bf16.gmra.mxu0 %v493
        %v1418 = vpop.f32.mrf.mxu0
        %v1419 = vadd.f32 %v1405, %v1418
        %v1420 = vpop.f32.mrf.mxu0
        %v1421 = vadd.f32 %v1407, %v1420
        %1422 = vdwg.mxu0
        %1423 = vmatpush.bf16.msra.mxu0 %v1123
        %1424 = vmatpush.bf16.msra.mxu0 %v1120
        %1425 = vmatpush.bf16.msra.mxu0 %v1117
        %1426 = vmatpush.bf16.msra.mxu0 %v1114
        %1427 = vmatpush.bf16.msra.mxu0 %v1111
        %1428 = vmatpush.bf16.msra.mxu0 %v1108
        %1429 = vmatpush.bf16.msra.mxu0 %v1105
        %1430 = vmatpush.bf16.msra.mxu0 %v1102
        %1431 = vmatmul.bf16.gmra.mxu0 %v494
        %v1432 = vpop.f32.mrf.mxu0
        %v1433 = vadd.f32 %v1419, %v1432
        %v1434 = vpop.f32.mrf.mxu0
        %v1435 = vadd.f32 %v1421, %v1434
        %1436 = vdwg.mxu0
        %1437 = vmatpush.bf16.msra.mxu0 %v1004
        %1438 = vmatpush.bf16.msra.mxu0 %v1001
        %1439 = vmatpush.bf16.msra.mxu0 %v998
        %1440 = vmatpush.bf16.msra.mxu0 %v995
        %1441 = vmatpush.bf16.msra.mxu0 %v992
        %1442 = vmatpush.bf16.msra.mxu0 %v989
        %1443 = vmatpush.bf16.msra.mxu0 %v986
        %1444 = vmatpush.bf16.msra.mxu0 %v983
        %1445 = vmatmul.bf16.gmra.mxu0 %v489
        %v1446 = vpop.f32.mrf.mxu0
        %v1447 = vadd.f32 0.0, %v1446
        %v1448 = vpop.f32.mrf.mxu0
        %v1449 = vadd.f32 0.0, %v1448
        %1450 = vdwg.mxu0
        %1451 = vmatpush.bf16.msra.mxu0 %v1028
        %1452 = vmatpush.bf16.msra.mxu0 %v1025
        %1453 = vmatpush.bf16.msra.mxu0 %v1022
        %1454 = vmatpush.bf16.msra.mxu0 %v1019
        %1455 = vmatpush.bf16.msra.mxu0 %v1016
        %1456 = vmatpush.bf16.msra.mxu0 %v1013
        %1457 = vmatpush.bf16.msra.mxu0 %v1010
        %1458 = vmatpush.bf16.msra.mxu0 %v1007
        %1459 = vmatmul.bf16.gmra.mxu0 %v490
        %v1460 = vpop.f32.mrf.mxu0
        %v1461 = vadd.f32 %v1447, %v1460
        %v1462 = vpop.f32.mrf.mxu0
        %v1463 = vadd.f32 %v1449, %v1462
        %1464 = vdwg.mxu0
        %1465 = vmatpush.bf16.msra.mxu0 %v1052
        %1466 = vmatpush.bf16.msra.mxu0 %v1049
        %1467 = vmatpush.bf16.msra.mxu0 %v1046
        %1468 = vmatpush.bf16.msra.mxu0 %v1043
        %1469 = vmatpush.bf16.msra.mxu0 %v1040
        %1470 = vmatpush.bf16.msra.mxu0 %v1037
        %1471 = vmatpush.bf16.msra.mxu0 %v1034
        %1472 = vmatpush.bf16.msra.mxu0 %v1031
        %1473 = vmatmul.bf16.gmra.mxu0 %v491
        %v1474 = vpop.f32.mrf.mxu0
        %v1475 = vadd.f32 %v1461, %v1474
        %v1476 = vpop.f32.mrf.mxu0
        %v1477 = vadd.f32 %v1463, %v1476
        %1478 = vdwg.mxu0
        %1479 = vmatpush.bf16.msra.mxu0 %v1076
        %1480 = vmatpush.bf16.msra.mxu0 %v1073
        %1481 = vmatpush.bf16.msra.mxu0 %v1070
        %1482 = vmatpush.bf16.msra.mxu0 %v1067
        %1483 = vmatpush.bf16.msra.mxu0 %v1064
        %1484 = vmatpush.bf16.msra.mxu0 %v1061
        %1485 = vmatpush.bf16.msra.mxu0 %v1058
        %1486 = vmatpush.bf16.msra.mxu0 %v1055
        %1487 = vmatmul.bf16.gmra.mxu0 %v492
        %v1488 = vpop.f32.mrf.mxu0
        %v1489 = vadd.f32 %v1475, %v1488
        %v1490 = vpop.f32.mrf.mxu0
        %v1491 = vadd.f32 %v1477, %v1490
        %1492 = vdwg.mxu0
        %1493 = vmatpush.bf16.msra.mxu0 %v1100
        %1494 = vmatpush.bf16.msra.mxu0 %v1097
        %1495 = vmatpush.bf16.msra.mxu0 %v1094
        %1496 = vmatpush.bf16.msra.mxu0 %v1091
        %1497 = vmatpush.bf16.msra.mxu0 %v1088
        %1498 = vmatpush.bf16.msra.mxu0 %v1085
        %1499 = vmatpush.bf16.msra.mxu0 %v1082
        %1500 = vmatpush.bf16.msra.mxu0 %v1079
        %1501 = vmatmul.bf16.gmra.mxu0 %v493
        %v1502 = vpop.f32.mrf.mxu0
        %v1503 = vadd.f32 %v1489, %v1502
        %v1504 = vpop.f32.mrf.mxu0
        %v1505 = vadd.f32 %v1491, %v1504
        %1506 = vdwg.mxu0
        %1507 = vmatpush.bf16.msra.mxu0 %v1124
        %1508 = vmatpush.bf16.msra.mxu0 %v1121
        %1509 = vmatpush.bf16.msra.mxu0 %v1118
        %1510 = vmatpush.bf16.msra.mxu0 %v1115
        %1511 = vmatpush.bf16.msra.mxu0 %v1112
        %1512 = vmatpush.bf16.msra.mxu0 %v1109
        %1513 = vmatpush.bf16.msra.mxu0 %v1106
        %1514 = vmatpush.bf16.msra.mxu0 %v1103
        %1515 = vmatmul.bf16.gmra.mxu0 %v494
        %v1516 = vpop.f32.mrf.mxu0
        %v1517 = vadd.f32 %v1503, %v1516
        %v1518 = vpop.f32.mrf.mxu0
        %v1519 = vadd.f32 %v1505, %v1518
        %1520 = vdwg.mxu0
        %v1521 = vpack.c.bf16 %v1351, %v1349
        %v1522 = vpack.c.bf16 %v1435, %v1433
        %v1523 = vpack.c.bf16 %v1519, %v1517
        %v1524 = vld [vmem:[%s238] sm:$0xff]
        %v1525 = vld [vmem:[%s238 + $0x8] sm:$0xff]
        %v1526 = vld [vmem:[%s238 + $0x10] sm:$0xff]
        %v1527 = vld [vmem:[%s238 + $0x18] sm:$0xff]
        %v1528 = vld [vmem:[%s238 + $0x20] sm:$0xff]
        %v1529 = vld [vmem:[%s238 + $0x28] sm:$0xff]
        %v1530 = vld [vmem:[%s238 + $0x30] sm:$0xff]
        %v1531 = vld [vmem:[%s238 + $0x38] sm:$0xff]
        %v1532 = vld [vmem:[%s238 + $0x40] sm:$0xff]
        %v1533 = vld [vmem:[%s238 + $0x48] sm:$0xff]
        %v1534 = vld [vmem:[%s238 + $0x50] sm:$0xff]
        %v1535 = vld [vmem:[%s238 + $0x58] sm:$0xff]
        %v1536 = vld [vmem:[%s238 + $0x60] sm:$0xff]
        %v1537 = vld [vmem:[%s238 + $0x68] sm:$0xff]
        %v1538 = vld [vmem:[%s238 + $0x70] sm:$0xff]
        %v1539 = vld [vmem:[%s238 + $0x78] sm:$0xff]
        %v1540 = vld [vmem:[%s238 + $0x80] sm:$0xff]
        %v1541 = vld [vmem:[%s238 + $0x88] sm:$0xff]
        %v1542 = vld [vmem:[%s238 + $0x90] sm:$0xff]
        %v1543 = vld [vmem:[%s238 + $0x98] sm:$0xff]
        %v1544 = vld [vmem:[%s238 + $0xa0] sm:$0xff]
        %v1545 = vld [vmem:[%s238 + $0xa8] sm:$0xff]
        %v1546 = vld [vmem:[%s238 + $0xb0] sm:$0xff]
        %v1547 = vld [vmem:[%s238 + $0xb8] sm:$0xff]
        %v1548 = vld [vmem:[%s238 + $0xc0] sm:$0xff]
        %v1549 = vld [vmem:[%s238 + $0xc8] sm:$0xff]
        %v1550 = vld [vmem:[%s238 + $0xd0] sm:$0xff]
        %v1551 = vld [vmem:[%s238 + $0xd8] sm:$0xff]
        %v1552 = vld [vmem:[%s238 + $0xe0] sm:$0xff]
        %v1553 = vld [vmem:[%s238 + $0xe8] sm:$0xff]
        %v1554 = vld [vmem:[%s238 + $0xf0] sm:$0xff]
        %v1555 = vld [vmem:[%s238 + $0xf8] sm:$0xff]
        %v1556 = vld [vmem:[%s238 + $0x100] sm:$0xff]
        %v1557 = vld [vmem:[%s238 + $0x108] sm:$0xff]
        %v1558 = vld [vmem:[%s238 + $0x110] sm:$0xff]
        %v1559 = vld [vmem:[%s238 + $0x118] sm:$0xff]
        %v1560 = vld [vmem:[%s238 + $0x120] sm:$0xff]
        %v1561 = vld [vmem:[%s238 + $0x128] sm:$0xff]
        %v1562 = vld [vmem:[%s238 + $0x130] sm:$0xff]
        %v1563 = vld [vmem:[%s238 + $0x138] sm:$0xff]
        %v1564 = vld [vmem:[%s238 + $0x140] sm:$0xff]
        %v1565 = vld [vmem:[%s238 + $0x148] sm:$0xff]
        %v1566 = vld [vmem:[%s238 + $0x150] sm:$0xff]
        %v1567 = vld [vmem:[%s238 + $0x158] sm:$0xff]
        %v1568 = vld [vmem:[%s238 + $0x160] sm:$0xff]
        %v1569 = vld [vmem:[%s238 + $0x168] sm:$0xff]
        %v1570 = vld [vmem:[%s238 + $0x170] sm:$0xff]
        %v1571 = vld [vmem:[%s238 + $0x178] sm:$0xff]
        %v1572 = vld [vmem:[%s238 + $0x180] sm:$0xff]
        %v1573 = vld [vmem:[%s238 + $0x188] sm:$0xff]
        %v1574 = vld [vmem:[%s238 + $0x190] sm:$0xff]
        %v1575 = vld [vmem:[%s238 + $0x198] sm:$0xff]
        %v1576 = vld [vmem:[%s238 + $0x1a0] sm:$0xff]
        %v1577 = vld [vmem:[%s238 + $0x1a8] sm:$0xff]
        %v1578 = vld [vmem:[%s238 + $0x1b0] sm:$0xff]
        %v1579 = vld [vmem:[%s238 + $0x1b8] sm:$0xff]
        %v1580 = vld [vmem:[%s238 + $0x1c0] sm:$0xff]
        %v1581 = vld [vmem:[%s238 + $0x1c8] sm:$0xff]
        %v1582 = vld [vmem:[%s238 + $0x1d0] sm:$0xff]
        %v1583 = vld [vmem:[%s238 + $0x1d8] sm:$0xff]
        %v1584 = vld [vmem:[%s238 + $0x1e0] sm:$0xff]
        %v1585 = vld [vmem:[%s238 + $0x1e8] sm:$0xff]
        %v1586 = vld [vmem:[%s238 + $0x1f0] sm:$0xff]
        %v1587 = vld [vmem:[%s238 + $0x1f8] sm:$0xff]
        %v1588 = vld [vmem:[%s238 + $0x200] sm:$0xff]
        %v1589 = vld [vmem:[%s238 + $0x208] sm:$0xff]
        %v1590 = vld [vmem:[%s238 + $0x210] sm:$0xff]
        %v1591 = vld [vmem:[%s238 + $0x218] sm:$0xff]
        %v1592 = vld [vmem:[%s238 + $0x220] sm:$0xff]
        %v1593 = vld [vmem:[%s238 + $0x228] sm:$0xff]
        %v1594 = vld [vmem:[%s238 + $0x230] sm:$0xff]
        %v1595 = vld [vmem:[%s238 + $0x238] sm:$0xff]
        %v1596 = vld [vmem:[%s238 + $0x240] sm:$0xff]
        %v1597 = vld [vmem:[%s238 + $0x248] sm:$0xff]
        %v1598 = vld [vmem:[%s238 + $0x250] sm:$0xff]
        %v1599 = vld [vmem:[%s238 + $0x258] sm:$0xff]
        %v1600 = vld [vmem:[%s238 + $0x260] sm:$0xff]
        %v1601 = vld [vmem:[%s238 + $0x268] sm:$0xff]
        %v1602 = vld [vmem:[%s238 + $0x270] sm:$0xff]
        %v1603 = vld [vmem:[%s238 + $0x278] sm:$0xff]
        %v1604 = vld [vmem:[%s238 + $0x280] sm:$0xff]
        %v1605 = vld [vmem:[%s238 + $0x288] sm:$0xff]
        %v1606 = vld [vmem:[%s238 + $0x290] sm:$0xff]
        %v1607 = vld [vmem:[%s238 + $0x298] sm:$0xff]
        %v1608 = vld [vmem:[%s238 + $0x2a0] sm:$0xff]
        %v1609 = vld [vmem:[%s238 + $0x2a8] sm:$0xff]
        %v1610 = vld [vmem:[%s238 + $0x2b0] sm:$0xff]
        %v1611 = vld [vmem:[%s238 + $0x2b8] sm:$0xff]
        %v1612 = vld [vmem:[%s238 + $0x2c0] sm:$0xff]
        %v1613 = vld [vmem:[%s238 + $0x2c8] sm:$0xff]
        %v1614 = vld [vmem:[%s238 + $0x2d0] sm:$0xff]
        %v1615 = vld [vmem:[%s238 + $0x2d8] sm:$0xff]
        %v1616 = vld [vmem:[%s238 + $0x2e0] sm:$0xff]
        %v1617 = vld [vmem:[%s238 + $0x2e8] sm:$0xff]
        %v1618 = vld [vmem:[%s238 + $0x2f0] sm:$0xff]
        %v1619 = vld [vmem:[%s238 + $0x2f8] sm:$0xff]
        %v1716 = vunpack.c.l.b16 %v1524
        %v1717 = vunpack.c.h.b16 %v1524
        %v1718 = vunpack.c.l.b16 %v1525
        %v1719 = vunpack.c.h.b16 %v1525
        %v1720 = vunpack.c.l.b16 %v1526
        %v1721 = vunpack.c.h.b16 %v1526
        %v1722 = vunpack.c.l.b16 %v1527
        %v1723 = vunpack.c.h.b16 %v1527
        %v1724 = vunpack.c.l.b16 %v1528
        %v1725 = vunpack.c.h.b16 %v1528
        %v1726 = vunpack.c.l.b16 %v1529
        %v1727 = vunpack.c.h.b16 %v1529
        %v1728 = vunpack.c.l.b16 %v1530
        %v1729 = vunpack.c.h.b16 %v1530
        %v1730 = vunpack.c.l.b16 %v1531
        %v1731 = vunpack.c.h.b16 %v1531
        %v1732 = vunpack.c.l.b16 %v1532
        %v1733 = vunpack.c.h.b16 %v1532
        %v1734 = vunpack.c.l.b16 %v1533
        %v1735 = vunpack.c.h.b16 %v1533
        %v1736 = vunpack.c.l.b16 %v1534
        %v1737 = vunpack.c.h.b16 %v1534
        %v1738 = vunpack.c.l.b16 %v1535
        %v1739 = vunpack.c.h.b16 %v1535
        %v1740 = vunpack.c.l.b16 %v1536
        %v1741 = vunpack.c.h.b16 %v1536
        %v1742 = vunpack.c.l.b16 %v1537
        %v1743 = vunpack.c.h.b16 %v1537
        %v1744 = vunpack.c.l.b16 %v1538
        %v1745 = vunpack.c.h.b16 %v1538
        %v1746 = vunpack.c.l.b16 %v1539
        %v1747 = vunpack.c.h.b16 %v1539
        %v1748 = vunpack.c.l.b16 %v1540
        %v1749 = vunpack.c.h.b16 %v1540
        %v1750 = vunpack.c.l.b16 %v1541
        %v1751 = vunpack.c.h.b16 %v1541
        %v1752 = vunpack.c.l.b16 %v1542
        %v1753 = vunpack.c.h.b16 %v1542
        %v1754 = vunpack.c.l.b16 %v1543
        %v1755 = vunpack.c.h.b16 %v1543
        %v1756 = vunpack.c.l.b16 %v1544
        %v1757 = vunpack.c.h.b16 %v1544
        %v1758 = vunpack.c.l.b16 %v1545
        %v1759 = vunpack.c.h.b16 %v1545
        %v1760 = vunpack.c.l.b16 %v1546
        %v1761 = vunpack.c.h.b16 %v1546
        %v1762 = vunpack.c.l.b16 %v1547
        %v1763 = vunpack.c.h.b16 %v1547
        %v1764 = vunpack.c.l.b16 %v1548
        %v1765 = vunpack.c.h.b16 %v1548
        %v1766 = vunpack.c.l.b16 %v1549
        %v1767 = vunpack.c.h.b16 %v1549
        %v1768 = vunpack.c.l.b16 %v1550
        %v1769 = vunpack.c.h.b16 %v1550
        %v1770 = vunpack.c.l.b16 %v1551
        %v1771 = vunpack.c.h.b16 %v1551
        %v1772 = vunpack.c.l.b16 %v1552
        %v1773 = vunpack.c.h.b16 %v1552
        %v1774 = vunpack.c.l.b16 %v1553
        %v1775 = vunpack.c.h.b16 %v1553
        %v1776 = vunpack.c.l.b16 %v1554
        %v1777 = vunpack.c.h.b16 %v1554
        %v1778 = vunpack.c.l.b16 %v1555
        %v1779 = vunpack.c.h.b16 %v1555
        %v1780 = vunpack.c.l.b16 %v1556
        %v1781 = vunpack.c.h.b16 %v1556
        %v1782 = vunpack.c.l.b16 %v1557
        %v1783 = vunpack.c.h.b16 %v1557
        %v1784 = vunpack.c.l.b16 %v1558
        %v1785 = vunpack.c.h.b16 %v1558
        %v1786 = vunpack.c.l.b16 %v1559
        %v1787 = vunpack.c.h.b16 %v1559
        %v1788 = vunpack.c.l.b16 %v1560
        %v1789 = vunpack.c.h.b16 %v1560
        %v1790 = vunpack.c.l.b16 %v1561
        %v1791 = vunpack.c.h.b16 %v1561
        %v1792 = vunpack.c.l.b16 %v1562
        %v1793 = vunpack.c.h.b16 %v1562
        %v1794 = vunpack.c.l.b16 %v1563
        %v1795 = vunpack.c.h.b16 %v1563
        %v1796 = vunpack.c.l.b16 %v1564
        %v1797 = vunpack.c.h.b16 %v1564
        %v1798 = vunpack.c.l.b16 %v1565
        %v1799 = vunpack.c.h.b16 %v1565
        %v1800 = vunpack.c.l.b16 %v1566
        %v1801 = vunpack.c.h.b16 %v1566
        %v1802 = vunpack.c.l.b16 %v1567
        %v1803 = vunpack.c.h.b16 %v1567
        %v1804 = vunpack.c.l.b16 %v1568
        %v1805 = vunpack.c.h.b16 %v1568
        %v1806 = vunpack.c.l.b16 %v1569
        %v1807 = vunpack.c.h.b16 %v1569
        %v1808 = vunpack.c.l.b16 %v1570
        %v1809 = vunpack.c.h.b16 %v1570
        %v1810 = vunpack.c.l.b16 %v1571
        %v1811 = vunpack.c.h.b16 %v1571
        %v1812 = vunpack.c.l.b16 %v1572
        %v1813 = vunpack.c.h.b16 %v1572
        %v1814 = vunpack.c.l.b16 %v1573
        %v1815 = vunpack.c.h.b16 %v1573
        %v1816 = vunpack.c.l.b16 %v1574
        %v1817 = vunpack.c.h.b16 %v1574
        %v1818 = vunpack.c.l.b16 %v1575
        %v1819 = vunpack.c.h.b16 %v1575
        %v1820 = vunpack.c.l.b16 %v1576
        %v1821 = vunpack.c.h.b16 %v1576
        %v1822 = vunpack.c.l.b16 %v1577
        %v1823 = vunpack.c.h.b16 %v1577
        %v1824 = vunpack.c.l.b16 %v1578
        %v1825 = vunpack.c.h.b16 %v1578
        %v1826 = vunpack.c.l.b16 %v1579
        %v1827 = vunpack.c.h.b16 %v1579
        %v1828 = vunpack.c.l.b16 %v1580
        %v1829 = vunpack.c.h.b16 %v1580
        %v1830 = vunpack.c.l.b16 %v1581
        %v1831 = vunpack.c.h.b16 %v1581
        %v1832 = vunpack.c.l.b16 %v1582
        %v1833 = vunpack.c.h.b16 %v1582
        %v1834 = vunpack.c.l.b16 %v1583
        %v1835 = vunpack.c.h.b16 %v1583
        %v1836 = vunpack.c.l.b16 %v1584
        %v1837 = vunpack.c.h.b16 %v1584
        %v1838 = vunpack.c.l.b16 %v1585
        %v1839 = vunpack.c.h.b16 %v1585
        %v1840 = vunpack.c.l.b16 %v1586
        %v1841 = vunpack.c.h.b16 %v1586
        %v1842 = vunpack.c.l.b16 %v1587
        %v1843 = vunpack.c.h.b16 %v1587
        %v1844 = vunpack.c.l.b16 %v1588
        %v1845 = vunpack.c.h.b16 %v1588
        %v1846 = vunpack.c.l.b16 %v1589
        %v1847 = vunpack.c.h.b16 %v1589
        %v1848 = vunpack.c.l.b16 %v1590
        %v1849 = vunpack.c.h.b16 %v1590
        %v1850 = vunpack.c.l.b16 %v1591
        %v1851 = vunpack.c.h.b16 %v1591
        %v1852 = vunpack.c.l.b16 %v1592
        %v1853 = vunpack.c.h.b16 %v1592
        %v1854 = vunpack.c.l.b16 %v1593
        %v1855 = vunpack.c.h.b16 %v1593
        %v1856 = vunpack.c.l.b16 %v1594
        %v1857 = vunpack.c.h.b16 %v1594
        %v1858 = vunpack.c.l.b16 %v1595
        %v1859 = vunpack.c.h.b16 %v1595
        %v1860 = vunpack.c.l.b16 %v1596
        %v1861 = vunpack.c.h.b16 %v1596
        %v1862 = vunpack.c.l.b16 %v1597
        %v1863 = vunpack.c.h.b16 %v1597
        %v1864 = vunpack.c.l.b16 %v1598
        %v1865 = vunpack.c.h.b16 %v1598
        %v1866 = vunpack.c.l.b16 %v1599
        %v1867 = vunpack.c.h.b16 %v1599
        %v1868 = vunpack.c.l.b16 %v1600
        %v1869 = vunpack.c.h.b16 %v1600
        %v1870 = vunpack.c.l.b16 %v1601
        %v1871 = vunpack.c.h.b16 %v1601
        %v1872 = vunpack.c.l.b16 %v1602
        %v1873 = vunpack.c.h.b16 %v1602
        %v1874 = vunpack.c.l.b16 %v1603
        %v1875 = vunpack.c.h.b16 %v1603
        %v1876 = vunpack.c.l.b16 %v1604
        %v1877 = vunpack.c.h.b16 %v1604
        %v1878 = vunpack.c.l.b16 %v1605
        %v1879 = vunpack.c.h.b16 %v1605
        %v1880 = vunpack.c.l.b16 %v1606
        %v1881 = vunpack.c.h.b16 %v1606
        %v1882 = vunpack.c.l.b16 %v1607
        %v1883 = vunpack.c.h.b16 %v1607
        %v1884 = vunpack.c.l.b16 %v1608
        %v1885 = vunpack.c.h.b16 %v1608
        %v1886 = vunpack.c.l.b16 %v1609
        %v1887 = vunpack.c.h.b16 %v1609
        %v1888 = vunpack.c.l.b16 %v1610
        %v1889 = vunpack.c.h.b16 %v1610
        %v1890 = vunpack.c.l.b16 %v1611
        %v1891 = vunpack.c.h.b16 %v1611
        %v1892 = vunpack.c.l.b16 %v1612
        %v1893 = vunpack.c.h.b16 %v1612
        %v1894 = vunpack.c.l.b16 %v1613
        %v1895 = vunpack.c.h.b16 %v1613
        %v1896 = vunpack.c.l.b16 %v1614
        %v1897 = vunpack.c.h.b16 %v1614
        %v1898 = vunpack.c.l.b16 %v1615
        %v1899 = vunpack.c.h.b16 %v1615
        %v1900 = vunpack.c.l.b16 %v1616
        %v1901 = vunpack.c.h.b16 %v1616
        %v1902 = vunpack.c.l.b16 %v1617
        %v1903 = vunpack.c.h.b16 %v1617
        %v1904 = vunpack.c.l.b16 %v1618
        %v1905 = vunpack.c.h.b16 %v1618
        %v1906 = vunpack.c.l.b16 %v1619
        %v1907 = vunpack.c.h.b16 %v1619
        %v1908 = vpack.c.b16 %v1720, %v1716
        %v1909 = vpack.c.b16 %v1721, %v1717
        %v1910 = vpack.c.b16 %v1722, %v1718
        %v1911 = vpack.c.b16 %v1723, %v1719
        %v1912 = vpack.c.b16 %v1728, %v1724
        %v1913 = vpack.c.b16 %v1729, %v1725
        %v1914 = vpack.c.b16 %v1730, %v1726
        %v1915 = vpack.c.b16 %v1731, %v1727
        %v1916 = vpack.c.b16 %v1736, %v1732
        %v1917 = vpack.c.b16 %v1737, %v1733
        %v1918 = vpack.c.b16 %v1738, %v1734
        %v1919 = vpack.c.b16 %v1739, %v1735
        %v1920 = vpack.c.b16 %v1744, %v1740
        %v1921 = vpack.c.b16 %v1745, %v1741
        %v1922 = vpack.c.b16 %v1746, %v1742
        %v1923 = vpack.c.b16 %v1747, %v1743
        %v1924 = vpack.c.b16 %v1752, %v1748
        %v1925 = vpack.c.b16 %v1753, %v1749
        %v1926 = vpack.c.b16 %v1754, %v1750
        %v1927 = vpack.c.b16 %v1755, %v1751
        %v1928 = vpack.c.b16 %v1760, %v1756
        %v1929 = vpack.c.b16 %v1761, %v1757
        %v1930 = vpack.c.b16 %v1762, %v1758
        %v1931 = vpack.c.b16 %v1763, %v1759
        %v1932 = vpack.c.b16 %v1768, %v1764
        %v1933 = vpack.c.b16 %v1769, %v1765
        %v1934 = vpack.c.b16 %v1770, %v1766
        %v1935 = vpack.c.b16 %v1771, %v1767
        %v1936 = vpack.c.b16 %v1776, %v1772
        %v1937 = vpack.c.b16 %v1777, %v1773
        %v1938 = vpack.c.b16 %v1778, %v1774
        %v1939 = vpack.c.b16 %v1779, %v1775
        %v1940 = vpack.c.b16 %v1784, %v1780
        %v1941 = vpack.c.b16 %v1785, %v1781
        %v1942 = vpack.c.b16 %v1786, %v1782
        %v1943 = vpack.c.b16 %v1787, %v1783
        %v1944 = vpack.c.b16 %v1792, %v1788
        %v1945 = vpack.c.b16 %v1793, %v1789
        %v1946 = vpack.c.b16 %v1794, %v1790
        %v1947 = vpack.c.b16 %v1795, %v1791
        %v1948 = vpack.c.b16 %v1800, %v1796
        %v1949 = vpack.c.b16 %v1801, %v1797
        %v1950 = vpack.c.b16 %v1802, %v1798
        %v1951 = vpack.c.b16 %v1803, %v1799
        %v1952 = vpack.c.b16 %v1808, %v1804
        %v1953 = vpack.c.b16 %v1809, %v1805
        %v1954 = vpack.c.b16 %v1810, %v1806
        %v1955 = vpack.c.b16 %v1811, %v1807
        %v1956 = vpack.c.b16 %v1816, %v1812
        %v1957 = vpack.c.b16 %v1817, %v1813
        %v1958 = vpack.c.b16 %v1818, %v1814
        %v1959 = vpack.c.b16 %v1819, %v1815
        %v1960 = vpack.c.b16 %v1824, %v1820
        %v1961 = vpack.c.b16 %v1825, %v1821
        %v1962 = vpack.c.b16 %v1826, %v1822
        %v1963 = vpack.c.b16 %v1827, %v1823
        %v1964 = vpack.c.b16 %v1832, %v1828
        %v1965 = vpack.c.b16 %v1833, %v1829
        %v1966 = vpack.c.b16 %v1834, %v1830
        %v1967 = vpack.c.b16 %v1835, %v1831
        %v1968 = vpack.c.b16 %v1840, %v1836
        %v1969 = vpack.c.b16 %v1841, %v1837
        %v1970 = vpack.c.b16 %v1842, %v1838
        %v1971 = vpack.c.b16 %v1843, %v1839
        %v1972 = vpack.c.b16 %v1848, %v1844
        %v1973 = vpack.c.b16 %v1849, %v1845
        %v1974 = vpack.c.b16 %v1850, %v1846
        %v1975 = vpack.c.b16 %v1851, %v1847
        %v1976 = vpack.c.b16 %v1856, %v1852
        %v1977 = vpack.c.b16 %v1857, %v1853
        %v1978 = vpack.c.b16 %v1858, %v1854
        %v1979 = vpack.c.b16 %v1859, %v1855
        %v1980 = vpack.c.b16 %v1864, %v1860
        %v1981 = vpack.c.b16 %v1865, %v1861
        %v1982 = vpack.c.b16 %v1866, %v1862
        %v1983 = vpack.c.b16 %v1867, %v1863
        %v1984 = vpack.c.b16 %v1872, %v1868
        %v1985 = vpack.c.b16 %v1873, %v1869
        %v1986 = vpack.c.b16 %v1874, %v1870
        %v1987 = vpack.c.b16 %v1875, %v1871
        %v1988 = vpack.c.b16 %v1880, %v1876
        %v1989 = vpack.c.b16 %v1881, %v1877
        %v1990 = vpack.c.b16 %v1882, %v1878
        %v1991 = vpack.c.b16 %v1883, %v1879
        %v1992 = vpack.c.b16 %v1888, %v1884
        %v1993 = vpack.c.b16 %v1889, %v1885
        %v1994 = vpack.c.b16 %v1890, %v1886
        %v1995 = vpack.c.b16 %v1891, %v1887
        %v1996 = vpack.c.b16 %v1896, %v1892
        %v1997 = vpack.c.b16 %v1897, %v1893
        %v1998 = vpack.c.b16 %v1898, %v1894
        %v1999 = vpack.c.b16 %v1899, %v1895
        %v2000 = vpack.c.b16 %v1904, %v1900
        %v2001 = vpack.c.b16 %v1905, %v1901
        %v2002 = vpack.c.b16 %v1906, %v1902
        %v2003 = vpack.c.b16 %v1907, %v1903
        %2100 = vmatpush.bf16.msra.mxu0 %v1936
        %2101 = vmatpush.bf16.msra.mxu0 %v1932
        %2102 = vmatpush.bf16.msra.mxu0 %v1928
        %2103 = vmatpush.bf16.msra.mxu0 %v1924
        %2104 = vmatpush.bf16.msra.mxu0 %v1920
        %2105 = vmatpush.bf16.msra.mxu0 %v1916
        %2106 = vmatpush.bf16.msra.mxu0 %v1912
        %2107 = vmatpush.bf16.msra.mxu0 %v1908
        %2108 = vmatmul.bf16.gmra.mxu0 %v1521
        %v2109 = vpop.f32.mrf.mxu0
        %v2110 = vadd.f32 0.0, %v2109
        %v2111 = vpop.f32.mrf.mxu0
        %v2112 = vadd.f32 0.0, %v2111
        %2113 = vdwg.mxu0
        %2114 = vmatpush.bf16.msra.mxu0 %v1968
        %2115 = vmatpush.bf16.msra.mxu0 %v1964
        %2116 = vmatpush.bf16.msra.mxu0 %v1960
        %2117 = vmatpush.bf16.msra.mxu0 %v1956
        %2118 = vmatpush.bf16.msra.mxu0 %v1952
        %2119 = vmatpush.bf16.msra.mxu0 %v1948
        %2120 = vmatpush.bf16.msra.mxu0 %v1944
        %2121 = vmatpush.bf16.msra.mxu0 %v1940
        %2122 = vmatmul.bf16.gmra.mxu0 %v1522
        %v2123 = vpop.f32.mrf.mxu0
        %v2124 = vadd.f32 %v2110, %v2123
        %v2125 = vpop.f32.mrf.mxu0
        %v2126 = vadd.f32 %v2112, %v2125
        %2127 = vdwg.mxu0
        %2128 = vmatpush.bf16.msra.mxu0 %v2000
        %2129 = vmatpush.bf16.msra.mxu0 %v1996
        %2130 = vmatpush.bf16.msra.mxu0 %v1992
        %2131 = vmatpush.bf16.msra.mxu0 %v1988
        %2132 = vmatpush.bf16.msra.mxu0 %v1984
        %2133 = vmatpush.bf16.msra.mxu0 %v1980
        %2134 = vmatpush.bf16.msra.mxu0 %v1976
        %2135 = vmatpush.bf16.msra.mxu0 %v1972
        %2136 = vmatmul.bf16.gmra.mxu0 %v1523
        %v2137 = vpop.f32.mrf.mxu0
        %v2138 = vadd.f32 %v2124, %v2137
        %v2139 = vpop.f32.mrf.mxu0
        %v2140 = vadd.f32 %v2126, %v2139
        %2141 = vdwg.mxu0
        %2142 = vmatpush.bf16.msra.mxu0 %v1937
        %2143 = vmatpush.bf16.msra.mxu0 %v1933
        %2144 = vmatpush.bf16.msra.mxu0 %v1929
        %2145 = vmatpush.bf16.msra.mxu0 %v1925
        %2146 = vmatpush.bf16.msra.mxu0 %v1921
        %2147 = vmatpush.bf16.msra.mxu0 %v1917
        %2148 = vmatpush.bf16.msra.mxu0 %v1913
        %2149 = vmatpush.bf16.msra.mxu0 %v1909
        %2150 = vmatmul.bf16.gmra.mxu0 %v1521
        %v2151 = vpop.f32.mrf.mxu0
        %v2152 = vadd.f32 0.0, %v2151
        %v2153 = vpop.f32.mrf.mxu0
        %v2154 = vadd.f32 0.0, %v2153
        %2155 = vdwg.mxu0
        %2156 = vmatpush.bf16.msra.mxu0 %v1969
        %2157 = vmatpush.bf16.msra.mxu0 %v1965
        %2158 = vmatpush.bf16.msra.mxu0 %v1961
        %2159 = vmatpush.bf16.msra.mxu0 %v1957
        %2160 = vmatpush.bf16.msra.mxu0 %v1953
        %2161 = vmatpush.bf16.msra.mxu0 %v1949
        %2162 = vmatpush.bf16.msra.mxu0 %v1945
        %2163 = vmatpush.bf16.msra.mxu0 %v1941
        %2164 = vmatmul.bf16.gmra.mxu0 %v1522
        %v2165 = vpop.f32.mrf.mxu0
        %v2166 = vadd.f32 %v2152, %v2165
        %v2167 = vpop.f32.mrf.mxu0
        %v2168 = vadd.f32 %v2154, %v2167
        %2169 = vdwg.mxu0
        %2170 = vmatpush.bf16.msra.mxu0 %v2001
        %2171 = vmatpush.bf16.msra.mxu0 %v1997
        %2172 = vmatpush.bf16.msra.mxu0 %v1993
        %2173 = vmatpush.bf16.msra.mxu0 %v1989
        %2174 = vmatpush.bf16.msra.mxu0 %v1985
        %2175 = vmatpush.bf16.msra.mxu0 %v1981
        %2176 = vmatpush.bf16.msra.mxu0 %v1977
        %2177 = vmatpush.bf16.msra.mxu0 %v1973
        %2178 = vmatmul.bf16.gmra.mxu0 %v1523
        %v2179 = vpop.f32.mrf.mxu0
        %v2180 = vadd.f32 %v2166, %v2179
        %v2181 = vpop.f32.mrf.mxu0
        %v2182 = vadd.f32 %v2168, %v2181
        %2183 = vdwg.mxu0
        %2184 = vmatpush.bf16.msra.mxu0 %v1938
        %2185 = vmatpush.bf16.msra.mxu0 %v1934
        %2186 = vmatpush.bf16.msra.mxu0 %v1930
        %2187 = vmatpush.bf16.msra.mxu0 %v1926
        %2188 = vmatpush.bf16.msra.mxu0 %v1922
        %2189 = vmatpush.bf16.msra.mxu0 %v1918
        %2190 = vmatpush.bf16.msra.mxu0 %v1914
        %2191 = vmatpush.bf16.msra.mxu0 %v1910
        %2192 = vmatmul.bf16.gmra.mxu0 %v1521
        %v2193 = vpop.f32.mrf.mxu0
        %v2194 = vadd.f32 0.0, %v2193
        %v2195 = vpop.f32.mrf.mxu0
        %v2196 = vadd.f32 0.0, %v2195
        %2197 = vdwg.mxu0
        %2198 = vmatpush.bf16.msra.mxu0 %v1970
        %2199 = vmatpush.bf16.msra.mxu0 %v1966
        %2200 = vmatpush.bf16.msra.mxu0 %v1962
        %2201 = vmatpush.bf16.msra.mxu0 %v1958
        %2202 = vmatpush.bf16.msra.mxu0 %v1954
        %2203 = vmatpush.bf16.msra.mxu0 %v1950
        %2204 = vmatpush.bf16.msra.mxu0 %v1946
        %2205 = vmatpush.bf16.msra.mxu0 %v1942
        %2206 = vmatmul.bf16.gmra.mxu0 %v1522
        %v2207 = vpop.f32.mrf.mxu0
        %v2208 = vadd.f32 %v2194, %v2207
        %v2209 = vpop.f32.mrf.mxu0
        %v2210 = vadd.f32 %v2196, %v2209
        %2211 = vdwg.mxu0
        %2212 = vmatpush.bf16.msra.mxu0 %v2002
        %2213 = vmatpush.bf16.msra.mxu0 %v1998
        %2214 = vmatpush.bf16.msra.mxu0 %v1994
        %2215 = vmatpush.bf16.msra.mxu0 %v1990
        %2216 = vmatpush.bf16.msra.mxu0 %v1986
        %2217 = vmatpush.bf16.msra.mxu0 %v1982
        %2218 = vmatpush.bf16.msra.mxu0 %v1978
        %2219 = vmatpush.bf16.msra.mxu0 %v1974
        %2220 = vmatmul.bf16.gmra.mxu0 %v1523
        %v2221 = vpop.f32.mrf.mxu0
        %v2222 = vadd.f32 %v2208, %v2221
        %v2223 = vpop.f32.mrf.mxu0
        %v2224 = vadd.f32 %v2210, %v2223
        %2225 = vdwg.mxu0
        %2226 = vmatpush.bf16.msra.mxu0 %v1939
        %2227 = vmatpush.bf16.msra.mxu0 %v1935
        %2228 = vmatpush.bf16.msra.mxu0 %v1931
        %2229 = vmatpush.bf16.msra.mxu0 %v1927
        %2230 = vmatpush.bf16.msra.mxu0 %v1923
        %2231 = vmatpush.bf16.msra.mxu0 %v1919
        %2232 = vmatpush.bf16.msra.mxu0 %v1915
        %2233 = vmatpush.bf16.msra.mxu0 %v1911
        %2234 = vmatmul.bf16.gmra.mxu0 %v1521
        %v2235 = vpop.f32.mrf.mxu0
        %v2236 = vadd.f32 0.0, %v2235
        %v2237 = vpop.f32.mrf.mxu0
        %v2238 = vadd.f32 0.0, %v2237
        %2239 = vdwg.mxu0
        %2240 = vmatpush.bf16.msra.mxu0 %v1971
        %2241 = vmatpush.bf16.msra.mxu0 %v1967
        %2242 = vmatpush.bf16.msra.mxu0 %v1963
        %2243 = vmatpush.bf16.msra.mxu0 %v1959
        %2244 = vmatpush.bf16.msra.mxu0 %v1955
        %2245 = vmatpush.bf16.msra.mxu0 %v1951
        %2246 = vmatpush.bf16.msra.mxu0 %v1947
        %2247 = vmatpush.bf16.msra.mxu0 %v1943
        %2248 = vmatmul.bf16.gmra.mxu0 %v1522
        %v2249 = vpop.f32.mrf.mxu0
        %v2250 = vadd.f32 %v2236, %v2249
        %v2251 = vpop.f32.mrf.mxu0
        %v2252 = vadd.f32 %v2238, %v2251
        %2253 = vdwg.mxu0
        %2254 = vmatpush.bf16.msra.mxu0 %v2003
        %2255 = vmatpush.bf16.msra.mxu0 %v1999
        %2256 = vmatpush.bf16.msra.mxu0 %v1995
        %2257 = vmatpush.bf16.msra.mxu0 %v1991
        %2258 = vmatpush.bf16.msra.mxu0 %v1987
        %2259 = vmatpush.bf16.msra.mxu0 %v1983
        %2260 = vmatpush.bf16.msra.mxu0 %v1979
        %2261 = vmatpush.bf16.msra.mxu0 %v1975
        %2262 = vmatmul.bf16.gmra.mxu0 %v1523
        %v2263 = vpop.f32.mrf.mxu0
        %v2264 = vadd.f32 %v2250, %v2263
        %v2265 = vpop.f32.mrf.mxu0
        %v2266 = vadd.f32 %v2252, %v2265
        %2267 = vdwg.mxu0
        %2268 = vst [vmem:[%s271] sm:$0xff] %v2138
        %2269 = vst [vmem:[%s271 + $0x8] sm:$0xff] %v2180
        %2270 = vst [vmem:[%s271 + $0x10] sm:$0xff] %v2222
        %2271 = vst [vmem:[%s271 + $0x18] sm:$0xff] %v2264
        %2272 = vst [vmem:[%s271 + $0x20] sm:$0xff] %v2140
        %2273 = vst [vmem:[%s271 + $0x28] sm:$0xff] %v2182
        %2274 = vst [vmem:[%s271 + $0x30] sm:$0xff] %v2224
        %2275 = vst [vmem:[%s271 + $0x38] sm:$0xff] %v2266
        %s2276 = sand.u32 %s109, 1
        %s2277 = scalar_lea.sflag [#allocation4], %s2276
        %s2278 = sand.u32 %s109, 1
        %s2279 = smul.addr %s2278, 64
        %s2280 = scalar_lea.vmem [#allocation8], %s2279
        // Predicated region
        $region45: #{tpu_custom_call.1} parent=31 // pred_check
          %p2281 = pneg %p119
        $region46: #{tpu_custom_call.1} parent=31 // pred_check_branch
          %2283 = sbr.rel (%p2281) target = $region48
        $region47: #{tpu_custom_call.1} parent=31 // pred_region
          %s2284 = smul.u32 4, %s23
          %2286 = vsyncadd %s2277, 0
          %s2287 = smul.addr %s2284, 8
          %s2288 = scalar_lea.hbm %s3, %s2287
          %s2289 = sshll.u32 %s2280, 4
          %s2290 = int_to_ptr.vmem [resolvable:$true] %s2289
          %s2291 = sshll.u32 %s2288, 4
          %s2292 = int_to_ptr.hbm [resolvable:$true] %s2291
          %2297 = dma.vmem_to_hbm [thread:$0]  %s2290, 1024, %s2292, %s2277, 512, 2048, 32
        $region48: #{tpu_custom_call.1} parent=31 // pred_fallthru
          _
      $region32: #{tpu_custom_call.1} parent=5 // pred_fallthru
        _
      %p2298 = scmp.le.s32.totalorder 2, %s18
      // Predicated region
      $region49: #{tpu_custom_call.1} parent=5 // pred_check
        %p2299 = pneg %p2298
      $region50: #{tpu_custom_call.1} parent=5 // pred_check_branch
        %2301 = sbr.rel (%p2299) target = $region52
      $region51: #{tpu_custom_call.1} parent=5 // pred_region
        %s2302 = ssub.s32 %s18, 2
        // Predicated region
        $region53: #{tpu_custom_call.1} parent=51 // pred_check
          %p2303 = pneg %p125
        $region54: #{tpu_custom_call.1} parent=51 // pred_check_branch
          %2305 = sbr.rel (%p2303) target = $region56
        $region55: #{tpu_custom_call.1} parent=51 // pred_region
          %s2306 = sand.u32 %s110, 1
          %s2307 = scalar_lea.sflag [#allocation4], %s2306
          %s2308 = sand.u32 %s110, 1
          %s2309 = smul.addr %s2308, 64
          %s2310 = scalar_lea.vmem [#allocation8], %s2309
          %2312 = dma.done %s2307, 1024
        $region56: #{tpu_custom_call.1} parent=51 // pred_fallthru
          _
      $region52: #{tpu_custom_call.1} parent=5 // pred_fallthru
        _
    $region6: #{tpu_custom_call.1} parent=1 // loop_footer
      %s22 = sadd.s32 1, %s18
    $region7: #{tpu_custom_call.1} parent=1 // loop_footer_branch
      %17 = sbr.rel target = $region3
    $region8: #{tpu_custom_call.1} parent=1 // loop_exit
      _
    %2313 = vsyncpa [#allocation3], 1
    %s2314 = scalar_lea.sflag [#allocation3], 1
    %2315 = vsyncpa %s2314, 1
    %2316 = vsyncpa [#allocation6], 1
    %s2317 = scalar_lea.sflag [#allocation6], 1
    %2318 = vsyncpa %s2317, 1
    %2319 = vsyncpa [#allocation4], 1
    %s2320 = scalar_lea.sflag [#allocation4], 1
    %2321 = vsyncpa %s2320, 1

</llo_original>
